<compile_context>
chip_gen: v7x
topology: tpu7x:2x2x1
jax: 0.10.0
libtpu: 0.0.40
codegen_flags: <defaults>
</compile_context>

<pallas_src>
import functools

import jax
import jax.numpy as jnp
from jax.experimental import pallas as pl
from jax.experimental.pallas import tpu as pltpu


def lstm_fc_kernel(x_ref, w_ih_ref, w_hh_ref, b_ref, w_fc_ref, b_fc_ref,
                   out_ref, *, seq, batch):
  """LSTM recurrence + FC head over the last 7 timesteps, all in VMEM.

  x_ref    : (S*B, I)   time-major flattened input (row = t*B + b)
  w_ih_ref : (I, 4H)    input->gates weights, g-block columns pre-scaled by 2
  w_hh_ref : (H, 4H)    hidden->gates weights, g-block columns pre-scaled by 2
  b_ref    : (1, 4H)    bias_ih + bias_hh, g-block pre-scaled by 2
  w_fc_ref : (H, O)     fc weight.T
  b_fc_ref : (1, O)     fc bias
  out_ref  : (7*B, O)   fc(h_t) for the last 7 timesteps (rows ordered [t, b])
  """
  H = w_hh_ref.shape[0]

  # --- (2) Hoisted input projection ---------------------------------------
  # input_size == 1: VPU broadcast outer product, no MXU, no VMEM scratch.
  # gx stays a value; the fully-unrolled loop below slices it statically.
  if w_ih_ref.shape[0] == 1:
    gx = x_ref[...] * w_ih_ref[...] + b_ref[...]             # (S*B, 4H)
  else:
    gx = jnp.dot(x_ref[...], w_ih_ref[...],
                 preferred_element_type=jnp.float32) + b_ref[...]

  # Loop-invariant recurrent weight, hoisted out of the recurrence.
  # TODO(synk): if a bundle audit shows per-step RHS re-staging, keep W_hh
  # resident via pltpu.matmul_push_rhs / matmul_acc_lhs / matmul_pop (and on
  # v7x seed the MRB accumulator with gx[t] so the add happens in the MXU).
  w_hh = w_hh_ref[...]                                       # (H, 4H)

  h = jnp.zeros((batch, H), jnp.float32)
  c = jnp.zeros((batch, H), jnp.float32)

  first_kept = seq - 7
  kept = []
  # --- (3) Static, fully-unrolled recurrence -------------------------------
  for t in range(seq):
    gates = gx[t * batch:(t + 1) * batch, :] + jnp.dot(
        h, w_hh, preferred_element_type=jnp.float32)         # (B, 4H)

    # --- (1) Single EUP transcendental over the whole gate vreg -----------
    # g-block pre-activations were pre-scaled by 2, so tanh(x) = 2*sig(2x)-1.
    s = jax.nn.sigmoid(gates)

    # PyTorch gate ordering: i, f, g, o.  These lane slices are fully static;
    # Mosaic lowers the nonzero lane offsets to XLU lane rotates (free slot).
    # If an MLIR audit ever shows select/copy chains instead, replace with an
    # explicit pltpu.roll alignment of the gate vreg.
    i_g = s[:, 0 * H:1 * H]
    f_g = s[:, 1 * H:2 * H]
    g_g = 2.0 * s[:, 2 * H:3 * H] - 1.0                      # tanh via sigmoid
    o_g = s[:, 3 * H:4 * H]

    c = f_g * c + i_g * g_g
    h = o_g * jnp.tanh(c)

    if t >= first_kept:          # static Python condition: no pl.when, no
      kept.append(h)             # masked sub-128-lane stores, no hbuf scratch

  # --- (4) Single lane-dense FC matmul over the 7 kept steps + one store ---
  h7 = jnp.concatenate(kept, axis=0)                         # (7*B, H)
  out_ref[...] = (
      jnp.dot(h7, w_fc_ref[...], preferred_element_type=jnp.float32)
      + b_fc_ref[...]
  )


@jax.jit
def lstm_model_forward(x, w_ih, w_hh, b_ih, b_hh, w_fc, b_fc):
  """Forward pass of LSTMModel (batch_first nn.LSTM + fc, last 7 steps).

  Parameters in their native PyTorch shapes:
    w_ih: (4H, I)  lstm.weight_ih_l0      b_ih: (4H,)
    w_hh: (4H, H)  lstm.weight_hh_l0      b_hh: (4H,)
    w_fc: (O, H)   fc.weight              b_fc: (O,)
    x   : (B, S, I)
  Returns (B, 7, O), matching torch's out[:, -7:, :].
  """
  B, S, I = x.shape
  assert S >= 7, "module returns out[:, -7:, :]; need seq_len >= 7"
  H = w_hh.shape[1]
  O = w_fc.shape[0]
  G = 4 * H

  # One-time parameter prep (layout plumbing, not per-step compute):
  #  * scale the g-gate block by 2 so the kernel uses tanh(x) = 2*sigmoid(2x)-1
  #  * transpose to (in, out) layouts; fold the two biases together.
  gate_scale = jnp.ones((1, G), jnp.float32).at[:, 2 * H:3 * H].set(2.0)
  w_ih_t = w_ih.astype(jnp.float32).T * gate_scale            # (I, 4H)
  w_hh_t = w_hh.astype(jnp.float32).T * gate_scale            # (H, 4H)
  b_all = ((b_ih + b_hh).astype(jnp.float32) * gate_scale[0]).reshape(1, G)
  w_fc_t = w_fc.astype(jnp.float32).T                         # (H, O)
  b_fc_r = b_fc.astype(jnp.float32).reshape(1, O)

  # Time-major flatten so row t*B + b is timestep t of batch element b.
  x2d = jnp.transpose(x, (1, 0, 2)).reshape(S * B, I).astype(jnp.float32)

  kernel = functools.partial(lstm_fc_kernel, seq=S, batch=B)
  out2d = pl.pallas_call(
      kernel,
      out_shape=jax.ShapeDtypeStruct((7 * B, O), jnp.float32),
      in_specs=[pl.BlockSpec(memory_space=pltpu.MemorySpace.VMEM)] * 6,
      out_specs=pl.BlockSpec(memory_space=pltpu.MemorySpace.VMEM),
      # Grid-less single call: total VMEM footprint here is < 100 KiB on every
      # generation.  Scaling notes (from the perf review):
      #   * If S*B grows, chunk the input projection over time or raise
      #     pltpu.CompilerParams(vmem_limit_bytes=...) — v5e's scoped default
      #     is only 16 MiB (v6e/v7x: 32 MiB; v7x physical VMEM is 64 MiB).
      #   * On v7x, once the per-step matmul is throughput-bound (B in the
      #     hundreds), split the batch over the two TensorCores with
      #     grid=(2,) + dimension_semantics=("parallel",).  At B=8 that would
      #     be pure overhead, so it is deliberately not done here.
  )(x2d, w_ih_t, w_hh_t, b_all, w_fc_t, b_fc_r)

  # Rows of out2d are ordered [t, b]  ->  (7, B, O)  ->  (B, 7, O).
  return jnp.transpose(out2d.reshape(7, B, O), (1, 0, 2))


def _reference_forward(x, w_ih, w_hh, b_ih, b_hh, w_fc, b_fc):
  """Pure-JAX mirror of the PyTorch module (for the correctness assert)."""
  B, S, I = x.shape
  H = w_hh.shape[1]
  h = jnp.zeros((B, H), jnp.float32)
  c = jnp.zeros((B, H), jnp.float32)
  outs = []
  for t in range(S):
    gates = x[:, t, :] @ w_ih.T + h @ w_hh.T + b_ih + b_hh
    i_g = jax.nn.sigmoid(gates[:, 0 * H:1 * H])
    f_g = jax.nn.sigmoid(gates[:, 1 * H:2 * H])
    g_g = jnp.tanh(gates[:, 2 * H:3 * H])
    o_g = jax.nn.sigmoid(gates[:, 3 * H:4 * H])
    c = f_g * c + i_g * g_g
    h = o_g * jnp.tanh(c)
    outs.append(h @ w_fc.T + b_fc)
  return jnp.stack(outs, axis=1)[:, -7:, :]


if __name__ == "__main__":
  # Small, deterministic configuration consistent with the module's forward
  # (input_size=1, output_size=1, seq_len >= 7 because of out[:, -7:, :]).
  batch_size = 8
  seq_len = 12
  input_size = 1
  hidden_size = 32
  output_size = 1

  key = jax.random.PRNGKey(0)
  ks = jax.random.split(key, 7)
  scale = hidden_size ** -0.5

  # PyTorch-shaped parameters.
  w_ih = jax.random.uniform(ks[0], (4 * hidden_size, input_size),
                            jnp.float32, -scale, scale)
  w_hh = jax.random.uniform(ks[1], (4 * hidden_size, hidden_size),
                            jnp.float32, -scale, scale)
  b_ih = jax.random.uniform(ks[2], (4 * hidden_size,), jnp.float32,
                            -scale, scale)
  b_hh = jax.random.uniform(ks[3], (4 * hidden_size,), jnp.float32,
                            -scale, scale)
  w_fc = jax.random.uniform(ks[4], (output_size, hidden_size), jnp.float32,
                            -scale, scale)
  b_fc = jax.random.uniform(ks[5], (output_size,), jnp.float32, -scale, scale)

  x = jax.random.normal(ks[6], (batch_size, seq_len, input_size), jnp.float32)

  out = lstm_model_forward(x, w_ih, w_hh, b_ih, b_hh, w_fc, b_fc)
  out = jax.block_until_ready(out)
  assert out.shape == (batch_size, 7, output_size), out.shape

  ref = _reference_forward(x, w_ih, w_hh, b_ih, b_hh, w_fc, b_fc)
  assert jnp.allclose(out, ref, atol=1e-4, rtol=1e-4), (
      "mismatch vs. reference: max abs err "
      f"{jnp.max(jnp.abs(out - ref))}")

  print("KERNEL_OK")
</pallas_src>

<mosaic_0001>
module attributes {stable_mosaic.version = 11 : i64} {
  func.func @lstm_fc_kernel(%arg0: memref<96x1xf32, #tpu.memory_space<vmem>>, %arg1: memref<1x128xf32, #tpu.memory_space<vmem>>, %arg2: memref<32x128xf32, #tpu.memory_space<vmem>>, %arg3: memref<1x128xf32, #tpu.memory_space<vmem>>, %arg4: memref<32x1xf32, #tpu.memory_space<vmem>>, %arg5: memref<1x1xf32, #tpu.memory_space<vmem>>, %arg6: memref<56x1xf32, #tpu.memory_space<vmem>>) attributes {dimension_semantics = [], scalar_prefetch = 0 : i64, scratch_operands = 0 : i64, tpu.core_type = #tpu.core_type<tc>} {
    %c0 = arith.constant 0 : index
    %c0_0 = arith.constant 0 : index
    %0 = vector.load %arg0[%c0, %c0_0] : memref<96x1xf32, #tpu.memory_space<vmem>>, vector<96x1xf32>
    %c0_1 = arith.constant 0 : index
    %c0_2 = arith.constant 0 : index
    %1 = vector.load %arg1[%c0_1, %c0_2] : memref<1x128xf32, #tpu.memory_space<vmem>>, vector<1x128xf32>
    %2 = vector.broadcast %0 : vector<96x1xf32> to vector<96x128xf32>
    %3 = vector.broadcast %1 : vector<1x128xf32> to vector<96x128xf32>
    %4 = arith.mulf %2, %3 : vector<96x128xf32>
    %c0_3 = arith.constant 0 : index
    %c0_4 = arith.constant 0 : index
    %5 = vector.load %arg3[%c0_3, %c0_4] : memref<1x128xf32, #tpu.memory_space<vmem>>, vector<1x128xf32>
    %6 = vector.broadcast %5 : vector<1x128xf32> to vector<96x128xf32>
    %7 = arith.addf %4, %6 : vector<96x128xf32>
    %c0_5 = arith.constant 0 : index
    %c0_6 = arith.constant 0 : index
    %8 = vector.load %arg2[%c0_5, %c0_6] : memref<32x128xf32, #tpu.memory_space<vmem>>, vector<32x128xf32>
    %cst = arith.constant 0.000000e+00 : f32
    %9 = vector.broadcast %cst : f32 to vector<8x32xf32>
    %cst_7 = arith.constant 0.000000e+00 : f32
    %10 = vector.broadcast %cst_7 : f32 to vector<8x32xf32>
    %11 = vector.extract_strided_slice %7 {offsets = [0, 0], sizes = [8, 128], strides = [1, 1]} : vector<96x128xf32> to vector<8x128xf32>
    %cst_8 = arith.constant dense<0.000000e+00> : vector<8x128xf32>
    %12 = tpu.matmul %9, %8, %cst_8 {dimension_numbers = #tpu.dot_dimension_numbers<[1], [0], [0], [1], [0, 0, 1, 1], [], []>} : vector<8x32xf32>, vector<32x128xf32>, vector<8x128xf32> -> vector<8x128xf32>
    %13 = arith.addf %11, %12 : vector<8x128xf32>
    %14 = arith.negf %13 : vector<8x128xf32>
    %15 = math.exp %14 : vector<8x128xf32>
    %cst_9 = arith.constant 1.000000e+00 : f32
    %16 = vector.broadcast %cst_9 : f32 to vector<8x128xf32>
    %17 = arith.addf %16, %15 : vector<8x128xf32>
    %18 = arith.divf %16, %17 : vector<8x128xf32>
    %19 = vector.extract_strided_slice %18 {offsets = [0, 0], sizes = [8, 32], strides = [1, 1]} : vector<8x128xf32> to vector<8x32xf32>
    %20 = vector.extract_strided_slice %18 {offsets = [0, 32], sizes = [8, 32], strides = [1, 1]} : vector<8x128xf32> to vector<8x32xf32>
    %21 = vector.extract_strided_slice %18 {offsets = [0, 64], sizes = [8, 32], strides = [1, 1]} : vector<8x128xf32> to vector<8x32xf32>
    %cst_10 = arith.constant 2.000000e+00 : f32
    %22 = vector.broadcast %cst_10 : f32 to vector<8x32xf32>
    %23 = arith.mulf %22, %21 : vector<8x32xf32>
    %cst_11 = arith.constant 1.000000e+00 : f32
    %24 = vector.broadcast %cst_11 : f32 to vector<8x32xf32>
    %25 = arith.subf %23, %24 : vector<8x32xf32>
    %26 = vector.extract_strided_slice %18 {offsets = [0, 96], sizes = [8, 32], strides = [1, 1]} : vector<8x128xf32> to vector<8x32xf32>
    %27 = arith.mulf %20, %10 : vector<8x32xf32>
    %28 = arith.mulf %19, %25 : vector<8x32xf32>
    %29 = arith.addf %27, %28 : vector<8x32xf32>
    %30 = math.tanh %29 : vector<8x32xf32>
    %31 = arith.mulf %26, %30 : vector<8x32xf32>
    %32 = vector.extract_strided_slice %7 {offsets = [8, 0], sizes = [8, 128], strides = [1, 1]} : vector<96x128xf32> to vector<8x128xf32>
    %cst_12 = arith.constant dense<0.000000e+00> : vector<8x128xf32>
    %33 = tpu.matmul %31, %8, %cst_12 {dimension_numbers = #tpu.dot_dimension_numbers<[1], [0], [0], [1], [0, 0, 1, 1], [], []>} : vector<8x32xf32>, vector<32x128xf32>, vector<8x128xf32> -> vector<8x128xf32>
    %34 = arith.addf %32, %33 : vector<8x128xf32>
    %35 = arith.negf %34 : vector<8x128xf32>
    %36 = math.exp %35 : vector<8x128xf32>
    %cst_13 = arith.constant 1.000000e+00 : f32
    %37 = vector.broadcast %cst_13 : f32 to vector<8x128xf32>
    %38 = arith.addf %37, %36 : vector<8x128xf32>
    %39 = arith.divf %37, %38 : vector<8x128xf32>
    %40 = vector.extract_strided_slice %39 {offsets = [0, 0], sizes = [8, 32], strides = [1, 1]} : vector<8x128xf32> to vector<8x32xf32>
    %41 = vector.extract_strided_slice %39 {offsets = [0, 32], sizes = [8, 32], strides = [1, 1]} : vector<8x128xf32> to vector<8x32xf32>
    %42 = vector.extract_strided_slice %39 {offsets = [0, 64], sizes = [8, 32], strides = [1, 1]} : vector<8x128xf32> to vector<8x32xf32>
    %cst_14 = arith.constant 2.000000e+00 : f32
    %43 = vector.broadcast %cst_14 : f32 to vector<8x32xf32>
    %44 = arith.mulf %43, %42 : vector<8x32xf32>
    %cst_15 = arith.constant 1.000000e+00 : f32
    %45 = vector.broadcast %cst_15 : f32 to vector<8x32xf32>
    %46 = arith.subf %44, %45 : vector<8x32xf32>
    %47 = vector.extract_strided_slice %39 {offsets = [0, 96], sizes = [8, 32], strides = [1, 1]} : vector<8x128xf32> to vector<8x32xf32>
    %48 = arith.mulf %41, %29 : vector<8x32xf32>
    %49 = arith.mulf %40, %46 : vector<8x32xf32>
    %50 = arith.addf %48, %49 : vector<8x32xf32>
    %51 = math.tanh %50 : vector<8x32xf32>
    %52 = arith.mulf %47, %51 : vector<8x32xf32>
    %53 = vector.extract_strided_slice %7 {offsets = [16, 0], sizes = [8, 128], strides = [1, 1]} : vector<96x128xf32> to vector<8x128xf32>
    %cst_16 = arith.constant dense<0.000000e+00> : vector<8x128xf32>
    %54 = tpu.matmul %52, %8, %cst_16 {dimension_numbers = #tpu.dot_dimension_numbers<[1], [0], [0], [1], [0, 0, 1, 1], [], []>} : vector<8x32xf32>, vector<32x128xf32>, vector<8x128xf32> -> vector<8x128xf32>
    %55 = arith.addf %53, %54 : vector<8x128xf32>
    %56 = arith.negf %55 : vector<8x128xf32>
    %57 = math.exp %56 : vector<8x128xf32>
    %cst_17 = arith.constant 1.000000e+00 : f32
    %58 = vector.broadcast %cst_17 : f32 to vector<8x128xf32>
    %59 = arith.addf %58, %57 : vector<8x128xf32>
    %60 = arith.divf %58, %59 : vector<8x128xf32>
    %61 = vector.extract_strided_slice %60 {offsets = [0, 0], sizes = [8, 32], strides = [1, 1]} : vector<8x128xf32> to vector<8x32xf32>
    %62 = vector.extract_strided_slice %60 {offsets = [0, 32], sizes = [8, 32], strides = [1, 1]} : vector<8x128xf32> to vector<8x32xf32>
    %63 = vector.extract_strided_slice %60 {offsets = [0, 64], sizes = [8, 32], strides = [1, 1]} : vector<8x128xf32> to vector<8x32xf32>
    %cst_18 = arith.constant 2.000000e+00 : f32
    %64 = vector.broadcast %cst_18 : f32 to vector<8x32xf32>
    %65 = arith.mulf %64, %63 : vector<8x32xf32>
    %cst_19 = arith.constant 1.000000e+00 : f32
    %66 = vector.broadcast %cst_19 : f32 to vector<8x32xf32>
    %67 = arith.subf %65, %66 : vector<8x32xf32>
    %68 = vector.extract_strided_slice %60 {offsets = [0, 96], sizes = [8, 32], strides = [1, 1]} : vector<8x128xf32> to vector<8x32xf32>
    %69 = arith.mulf %62, %50 : vector<8x32xf32>
    %70 = arith.mulf %61, %67 : vector<8x32xf32>
    %71 = arith.addf %69, %70 : vector<8x32xf32>
    %72 = math.tanh %71 : vector<8x32xf32>
    %73 = arith.mulf %68, %72 : vector<8x32xf32>
    %74 = vector.extract_strided_slice %7 {offsets = [24, 0], sizes = [8, 128], strides = [1, 1]} : vector<96x128xf32> to vector<8x128xf32>
    %cst_20 = arith.constant dense<0.000000e+00> : vector<8x128xf32>
    %75 = tpu.matmul %73, %8, %cst_20 {dimension_numbers = #tpu.dot_dimension_numbers<[1], [0], [0], [1], [0, 0, 1, 1], [], []>} : vector<8x32xf32>, vector<32x128xf32>, vector<8x128xf32> -> vector<8x128xf32>
    %76 = arith.addf %74, %75 : vector<8x128xf32>
    %77 = arith.negf %76 : vector<8x128xf32>
    %78 = math.exp %77 : vector<8x128xf32>
    %cst_21 = arith.constant 1.000000e+00 : f32
    %79 = vector.broadcast %cst_21 : f32 to vector<8x128xf32>
    %80 = arith.addf %79, %78 : vector<8x128xf32>
    %81 = arith.divf %79, %80 : vector<8x128xf32>
    %82 = vector.extract_strided_slice %81 {offsets = [0, 0], sizes = [8, 32], strides = [1, 1]} : vector<8x128xf32> to vector<8x32xf32>
    %83 = vector.extract_strided_slice %81 {offsets = [0, 32], sizes = [8, 32], strides = [1, 1]} : vector<8x128xf32> to vector<8x32xf32>
    %84 = vector.extract_strided_slice %81 {offsets = [0, 64], sizes = [8, 32], strides = [1, 1]} : vector<8x128xf32> to vector<8x32xf32>
    %cst_22 = arith.constant 2.000000e+00 : f32
    %85 = vector.broadcast %cst_22 : f32 to vector<8x32xf32>
    %86 = arith.mulf %85, %84 : vector<8x32xf32>
    %cst_23 = arith.constant 1.000000e+00 : f32
    %87 = vector.broadcast %cst_23 : f32 to vector<8x32xf32>
    %88 = arith.subf %86, %87 : vector<8x32xf32>
    %89 = vector.extract_strided_slice %81 {offsets = [0, 96], sizes = [8, 32], strides = [1, 1]} : vector<8x128xf32> to vector<8x32xf32>
    %90 = arith.mulf %83, %71 : vector<8x32xf32>
    %91 = arith.mulf %82, %88 : vector<8x32xf32>
    %92 = arith.addf %90, %91 : vector<8x32xf32>
    %93 = math.tanh %92 : vector<8x32xf32>
    %94 = arith.mulf %89, %93 : vector<8x32xf32>
    %95 = vector.extract_strided_slice %7 {offsets = [32, 0], sizes = [8, 128], strides = [1, 1]} : vector<96x128xf32> to vector<8x128xf32>
    %cst_24 = arith.constant dense<0.000000e+00> : vector<8x128xf32>
    %96 = tpu.matmul %94, %8, %cst_24 {dimension_numbers = #tpu.dot_dimension_numbers<[1], [0], [0], [1], [0, 0, 1, 1], [], []>} : vector<8x32xf32>, vector<32x128xf32>, vector<8x128xf32> -> vector<8x128xf32>
    %97 = arith.addf %95, %96 : vector<8x128xf32>
    %98 = arith.negf %97 : vector<8x128xf32>
    %99 = math.exp %98 : vector<8x128xf32>
    %cst_25 = arith.constant 1.000000e+00 : f32
    %100 = vector.broadcast %cst_25 : f32 to vector<8x128xf32>
    %101 = arith.addf %100, %99 : vector<8x128xf32>
    %102 = arith.divf %100, %101 : vector<8x128xf32>
    %103 = vector.extract_strided_slice %102 {offsets = [0, 0], sizes = [8, 32], strides = [1, 1]} : vector<8x128xf32> to vector<8x32xf32>
    %104 = vector.extract_strided_slice %102 {offsets = [0, 32], sizes = [8, 32], strides = [1, 1]} : vector<8x128xf32> to vector<8x32xf32>
    %105 = vector.extract_strided_slice %102 {offsets = [0, 64], sizes = [8, 32], strides = [1, 1]} : vector<8x128xf32> to vector<8x32xf32>
    %cst_26 = arith.constant 2.000000e+00 : f32
    %106 = vector.broadcast %cst_26 : f32 to vector<8x32xf32>
    %107 = arith.mulf %106, %105 : vector<8x32xf32>
    %cst_27 = arith.constant 1.000000e+00 : f32
    %108 = vector.broadcast %cst_27 : f32 to vector<8x32xf32>
    %109 = arith.subf %107, %108 : vector<8x32xf32>
    %110 = vector.extract_strided_slice %102 {offsets = [0, 96], sizes = [8, 32], strides = [1, 1]} : vector<8x128xf32> to vector<8x32xf32>
    %111 = arith.mulf %104, %92 : vector<8x32xf32>
    %112 = arith.mulf %103, %109 : vector<8x32xf32>
    %113 = arith.addf %111, %112 : vector<8x32xf32>
    %114 = math.tanh %113 : vector<8x32xf32>
    %115 = arith.mulf %110, %114 : vector<8x32xf32>
    %116 = vector.extract_strided_slice %7 {offsets = [40, 0], sizes = [8, 128], strides = [1, 1]} : vector<96x128xf32> to vector<8x128xf32>
    %cst_28 = arith.constant dense<0.000000e+00> : vector<8x128xf32>
    %117 = tpu.matmul %115, %8, %cst_28 {dimension_numbers = #tpu.dot_dimension_numbers<[1], [0], [0], [1], [0, 0, 1, 1], [], []>} : vector<8x32xf32>, vector<32x128xf32>, vector<8x128xf32> -> vector<8x128xf32>
    %118 = arith.addf %116, %117 : vector<8x128xf32>
    %119 = arith.negf %118 : vector<8x128xf32>
    %120 = math.exp %119 : vector<8x128xf32>
    %cst_29 = arith.constant 1.000000e+00 : f32
    %121 = vector.broadcast %cst_29 : f32 to vector<8x128xf32>
    %122 = arith.addf %121, %120 : vector<8x128xf32>
    %123 = arith.divf %121, %122 : vector<8x128xf32>
    %124 = vector.extract_strided_slice %123 {offsets = [0, 0], sizes = [8, 32], strides = [1, 1]} : vector<8x128xf32> to vector<8x32xf32>
    %125 = vector.extract_strided_slice %123 {offsets = [0, 32], sizes = [8, 32], strides = [1, 1]} : vector<8x128xf32> to vector<8x32xf32>
    %126 = vector.extract_strided_slice %123 {offsets = [0, 64], sizes = [8, 32], strides = [1, 1]} : vector<8x128xf32> to vector<8x32xf32>
    %cst_30 = arith.constant 2.000000e+00 : f32
    %127 = vector.broadcast %cst_30 : f32 to vector<8x32xf32>
    %128 = arith.mulf %127, %126 : vector<8x32xf32>
    %cst_31 = arith.constant 1.000000e+00 : f32
    %129 = vector.broadcast %cst_31 : f32 to vector<8x32xf32>
    %130 = arith.subf %128, %129 : vector<8x32xf32>
    %131 = vector.extract_strided_slice %123 {offsets = [0, 96], sizes = [8, 32], strides = [1, 1]} : vector<8x128xf32> to vector<8x32xf32>
    %132 = arith.mulf %125, %113 : vector<8x32xf32>
    %133 = arith.mulf %124, %130 : vector<8x32xf32>
    %134 = arith.addf %132, %133 : vector<8x32xf32>
    %135 = math.tanh %134 : vector<8x32xf32>
    %136 = arith.mulf %131, %135 : vector<8x32xf32>
    %137 = vector.extract_strided_slice %7 {offsets = [48, 0], sizes = [8, 128], strides = [1, 1]} : vector<96x128xf32> to vector<8x128xf32>
    %cst_32 = arith.constant dense<0.000000e+00> : vector<8x128xf32>
    %138 = tpu.matmul %136, %8, %cst_32 {dimension_numbers = #tpu.dot_dimension_numbers<[1], [0], [0], [1], [0, 0, 1, 1], [], []>} : vector<8x32xf32>, vector<32x128xf32>, vector<8x128xf32> -> vector<8x128xf32>
    %139 = arith.addf %137, %138 : vector<8x128xf32>
    %140 = arith.negf %139 : vector<8x128xf32>
    %141 = math.exp %140 : vector<8x128xf32>
    %cst_33 = arith.constant 1.000000e+00 : f32
    %142 = vector.broadcast %cst_33 : f32 to vector<8x128xf32>
    %143 = arith.addf %142, %141 : vector<8x128xf32>
    %144 = arith.divf %142, %143 : vector<8x128xf32>
    %145 = vector.extract_strided_slice %144 {offsets = [0, 0], sizes = [8, 32], strides = [1, 1]} : vector<8x128xf32> to vector<8x32xf32>
    %146 = vector.extract_strided_slice %144 {offsets = [0, 32], sizes = [8, 32], strides = [1, 1]} : vector<8x128xf32> to vector<8x32xf32>
    %147 = vector.extract_strided_slice %144 {offsets = [0, 64], sizes = [8, 32], strides = [1, 1]} : vector<8x128xf32> to vector<8x32xf32>
    %cst_34 = arith.constant 2.000000e+00 : f32
    %148 = vector.broadcast %cst_34 : f32 to vector<8x32xf32>
    %149 = arith.mulf %148, %147 : vector<8x32xf32>
    %cst_35 = arith.constant 1.000000e+00 : f32
    %150 = vector.broadcast %cst_35 : f32 to vector<8x32xf32>
    %151 = arith.subf %149, %150 : vector<8x32xf32>
    %152 = vector.extract_strided_slice %144 {offsets = [0, 96], sizes = [8, 32], strides = [1, 1]} : vector<8x128xf32> to vector<8x32xf32>
    %153 = arith.mulf %146, %134 : vector<8x32xf32>
    %154 = arith.mulf %145, %151 : vector<8x32xf32>
    %155 = arith.addf %153, %154 : vector<8x32xf32>
    %156 = math.tanh %155 : vector<8x32xf32>
    %157 = arith.mulf %152, %156 : vector<8x32xf32>
    %158 = vector.extract_strided_slice %7 {offsets = [56, 0], sizes = [8, 128], strides = [1, 1]} : vector<96x128xf32> to vector<8x128xf32>
    %cst_36 = arith.constant dense<0.000000e+00> : vector<8x128xf32>
    %159 = tpu.matmul %157, %8, %cst_36 {dimension_numbers = #tpu.dot_dimension_numbers<[1], [0], [0], [1], [0, 0, 1, 1], [], []>} : vector<8x32xf32>, vector<32x128xf32>, vector<8x128xf32> -> vector<8x128xf32>
    %160 = arith.addf %158, %159 : vector<8x128xf32>
    %161 = arith.negf %160 : vector<8x128xf32>
    %162 = math.exp %161 : vector<8x128xf32>
    %cst_37 = arith.constant 1.000000e+00 : f32
    %163 = vector.broadcast %cst_37 : f32 to vector<8x128xf32>
    %164 = arith.addf %163, %162 : vector<8x128xf32>
    %165 = arith.divf %163, %164 : vector<8x128xf32>
    %166 = vector.extract_strided_slice %165 {offsets = [0, 0], sizes = [8, 32], strides = [1, 1]} : vector<8x128xf32> to vector<8x32xf32>
    %167 = vector.extract_strided_slice %165 {offsets = [0, 32], sizes = [8, 32], strides = [1, 1]} : vector<8x128xf32> to vector<8x32xf32>
    %168 = vector.extract_strided_slice %165 {offsets = [0, 64], sizes = [8, 32], strides = [1, 1]} : vector<8x128xf32> to vector<8x32xf32>
    %cst_38 = arith.constant 2.000000e+00 : f32
    %169 = vector.broadcast %cst_38 : f32 to vector<8x32xf32>
    %170 = arith.mulf %169, %168 : vector<8x32xf32>
    %cst_39 = arith.constant 1.000000e+00 : f32
    %171 = vector.broadcast %cst_39 : f32 to vector<8x32xf32>
    %172 = arith.subf %170, %171 : vector<8x32xf32>
    %173 = vector.extract_strided_slice %165 {offsets = [0, 96], sizes = [8, 32], strides = [1, 1]} : vector<8x128xf32> to vector<8x32xf32>
    %174 = arith.mulf %167, %155 : vector<8x32xf32>
    %175 = arith.mulf %166, %172 : vector<8x32xf32>
    %176 = arith.addf %174, %175 : vector<8x32xf32>
    %177 = math.tanh %176 : vector<8x32xf32>
    %178 = arith.mulf %173, %177 : vector<8x32xf32>
    %179 = vector.extract_strided_slice %7 {offsets = [64, 0], sizes = [8, 128], strides = [1, 1]} : vector<96x128xf32> to vector<8x128xf32>
    %cst_40 = arith.constant dense<0.000000e+00> : vector<8x128xf32>
    %180 = tpu.matmul %178, %8, %cst_40 {dimension_numbers = #tpu.dot_dimension_numbers<[1], [0], [0], [1], [0, 0, 1, 1], [], []>} : vector<8x32xf32>, vector<32x128xf32>, vector<8x128xf32> -> vector<8x128xf32>
    %181 = arith.addf %179, %180 : vector<8x128xf32>
    %182 = arith.negf %181 : vector<8x128xf32>
    %183 = math.exp %182 : vector<8x128xf32>
    %cst_41 = arith.constant 1.000000e+00 : f32
    %184 = vector.broadcast %cst_41 : f32 to vector<8x128xf32>
    %185 = arith.addf %184, %183 : vector<8x128xf32>
    %186 = arith.divf %184, %185 : vector<8x128xf32>
    %187 = vector.extract_strided_slice %186 {offsets = [0, 0], sizes = [8, 32], strides = [1, 1]} : vector<8x128xf32> to vector<8x32xf32>
    %188 = vector.extract_strided_slice %186 {offsets = [0, 32], sizes = [8, 32], strides = [1, 1]} : vector<8x128xf32> to vector<8x32xf32>
    %189 = vector.extract_strided_slice %186 {offsets = [0, 64], sizes = [8, 32], strides = [1, 1]} : vector<8x128xf32> to vector<8x32xf32>
    %cst_42 = arith.constant 2.000000e+00 : f32
    %190 = vector.broadcast %cst_42 : f32 to vector<8x32xf32>
    %191 = arith.mulf %190, %189 : vector<8x32xf32>
    %cst_43 = arith.constant 1.000000e+00 : f32
    %192 = vector.broadcast %cst_43 : f32 to vector<8x32xf32>
    %193 = arith.subf %191, %192 : vector<8x32xf32>
    %194 = vector.extract_strided_slice %186 {offsets = [0, 96], sizes = [8, 32], strides = [1, 1]} : vector<8x128xf32> to vector<8x32xf32>
    %195 = arith.mulf %188, %176 : vector<8x32xf32>
    %196 = arith.mulf %187, %193 : vector<8x32xf32>
    %197 = arith.addf %195, %196 : vector<8x32xf32>
    %198 = math.tanh %197 : vector<8x32xf32>
    %199 = arith.mulf %194, %198 : vector<8x32xf32>
    %200 = vector.extract_strided_slice %7 {offsets = [72, 0], sizes = [8, 128], strides = [1, 1]} : vector<96x128xf32> to vector<8x128xf32>
    %cst_44 = arith.constant dense<0.000000e+00> : vector<8x128xf32>
    %201 = tpu.matmul %199, %8, %cst_44 {dimension_numbers = #tpu.dot_dimension_numbers<[1], [0], [0], [1], [0, 0, 1, 1], [], []>} : vector<8x32xf32>, vector<32x128xf32>, vector<8x128xf32> -> vector<8x128xf32>
    %202 = arith.addf %200, %201 : vector<8x128xf32>
    %203 = arith.negf %202 : vector<8x128xf32>
    %204 = math.exp %203 : vector<8x128xf32>
    %cst_45 = arith.constant 1.000000e+00 : f32
    %205 = vector.broadcast %cst_45 : f32 to vector<8x128xf32>
    %206 = arith.addf %205, %204 : vector<8x128xf32>
    %207 = arith.divf %205, %206 : vector<8x128xf32>
    %208 = vector.extract_strided_slice %207 {offsets = [0, 0], sizes = [8, 32], strides = [1, 1]} : vector<8x128xf32> to vector<8x32xf32>
    %209 = vector.extract_strided_slice %207 {offsets = [0, 32], sizes = [8, 32], strides = [1, 1]} : vector<8x128xf32> to vector<8x32xf32>
    %210 = vector.extract_strided_slice %207 {offsets = [0, 64], sizes = [8, 32], strides = [1, 1]} : vector<8x128xf32> to vector<8x32xf32>
    %cst_46 = arith.constant 2.000000e+00 : f32
    %211 = vector.broadcast %cst_46 : f32 to vector<8x32xf32>
    %212 = arith.mulf %211, %210 : vector<8x32xf32>
    %cst_47 = arith.constant 1.000000e+00 : f32
    %213 = vector.broadcast %cst_47 : f32 to vector<8x32xf32>
    %214 = arith.subf %212, %213 : vector<8x32xf32>
    %215 = vector.extract_strided_slice %207 {offsets = [0, 96], sizes = [8, 32], strides = [1, 1]} : vector<8x128xf32> to vector<8x32xf32>
    %216 = arith.mulf %209, %197 : vector<8x32xf32>
    %217 = arith.mulf %208, %214 : vector<8x32xf32>
    %218 = arith.addf %216, %217 : vector<8x32xf32>
    %219 = math.tanh %218 : vector<8x32xf32>
    %220 = arith.mulf %215, %219 : vector<8x32xf32>
    %221 = vector.extract_strided_slice %7 {offsets = [80, 0], sizes = [8, 128], strides = [1, 1]} : vector<96x128xf32> to vector<8x128xf32>
    %cst_48 = arith.constant dense<0.000000e+00> : vector<8x128xf32>
    %222 = tpu.matmul %220, %8, %cst_48 {dimension_numbers = #tpu.dot_dimension_numbers<[1], [0], [0], [1], [0, 0, 1, 1], [], []>} : vector<8x32xf32>, vector<32x128xf32>, vector<8x128xf32> -> vector<8x128xf32>
    %223 = arith.addf %221, %222 : vector<8x128xf32>
    %224 = arith.negf %223 : vector<8x128xf32>
    %225 = math.exp %224 : vector<8x128xf32>
    %cst_49 = arith.constant 1.000000e+00 : f32
    %226 = vector.broadcast %cst_49 : f32 to vector<8x128xf32>
    %227 = arith.addf %226, %225 : vector<8x128xf32>
    %228 = arith.divf %226, %227 : vector<8x128xf32>
    %229 = vector.extract_strided_slice %228 {offsets = [0, 0], sizes = [8, 32], strides = [1, 1]} : vector<8x128xf32> to vector<8x32xf32>
    %230 = vector.extract_strided_slice %228 {offsets = [0, 32], sizes = [8, 32], strides = [1, 1]} : vector<8x128xf32> to vector<8x32xf32>
    %231 = vector.extract_strided_slice %228 {offsets = [0, 64], sizes = [8, 32], strides = [1, 1]} : vector<8x128xf32> to vector<8x32xf32>
    %cst_50 = arith.constant 2.000000e+00 : f32
    %232 = vector.broadcast %cst_50 : f32 to vector<8x32xf32>
    %233 = arith.mulf %232, %231 : vector<8x32xf32>
    %cst_51 = arith.constant 1.000000e+00 : f32
    %234 = vector.broadcast %cst_51 : f32 to vector<8x32xf32>
    %235 = arith.subf %233, %234 : vector<8x32xf32>
    %236 = vector.extract_strided_slice %228 {offsets = [0, 96], sizes = [8, 32], strides = [1, 1]} : vector<8x128xf32> to vector<8x32xf32>
    %237 = arith.mulf %230, %218 : vector<8x32xf32>
    %238 = arith.mulf %229, %235 : vector<8x32xf32>
    %239 = arith.addf %237, %238 : vector<8x32xf32>
    %240 = math.tanh %239 : vector<8x32xf32>
    %241 = arith.mulf %236, %240 : vector<8x32xf32>
    %242 = vector.extract_strided_slice %7 {offsets = [88, 0], sizes = [8, 128], strides = [1, 1]} : vector<96x128xf32> to vector<8x128xf32>
    %cst_52 = arith.constant dense<0.000000e+00> : vector<8x128xf32>
    %243 = tpu.matmul %241, %8, %cst_52 {dimension_numbers = #tpu.dot_dimension_numbers<[1], [0], [0], [1], [0, 0, 1, 1], [], []>} : vector<8x32xf32>, vector<32x128xf32>, vector<8x128xf32> -> vector<8x128xf32>
    %244 = arith.addf %242, %243 : vector<8x128xf32>
    %245 = arith.negf %244 : vector<8x128xf32>
    %246 = math.exp %245 : vector<8x128xf32>
    %cst_53 = arith.constant 1.000000e+00 : f32
    %247 = vector.broadcast %cst_53 : f32 to vector<8x128xf32>
    %248 = arith.addf %247, %246 : vector<8x128xf32>
    %249 = arith.divf %247, %248 : vector<8x128xf32>
    %250 = vector.extract_strided_slice %249 {offsets = [0, 0], sizes = [8, 32], strides = [1, 1]} : vector<8x128xf32> to vector<8x32xf32>
    %251 = vector.extract_strided_slice %249 {offsets = [0, 32], sizes = [8, 32], strides = [1, 1]} : vector<8x128xf32> to vector<8x32xf32>
    %252 = vector.extract_strided_slice %249 {offsets = [0, 64], sizes = [8, 32], strides = [1, 1]} : vector<8x128xf32> to vector<8x32xf32>
    %cst_54 = arith.constant 2.000000e+00 : f32
    %253 = vector.broadcast %cst_54 : f32 to vector<8x32xf32>
    %254 = arith.mulf %253, %252 : vector<8x32xf32>
    %cst_55 = arith.constant 1.000000e+00 : f32
    %255 = vector.broadcast %cst_55 : f32 to vector<8x32xf32>
    %256 = arith.subf %254, %255 : vector<8x32xf32>
    %257 = vector.extract_strided_slice %249 {offsets = [0, 96], sizes = [8, 32], strides = [1, 1]} : vector<8x128xf32> to vector<8x32xf32>
    %258 = arith.mulf %251, %239 : vector<8x32xf32>
    %259 = arith.mulf %250, %256 : vector<8x32xf32>
    %260 = arith.addf %258, %259 : vector<8x32xf32>
    %261 = math.tanh %260 : vector<8x32xf32>
    %262 = arith.mulf %257, %261 : vector<8x32xf32>
    %263 = tpu.concatenate %136, %157, %178, %199, %220, %241, %262 in 0 : vector<8x32xf32>, vector<8x32xf32>, vector<8x32xf32>, vector<8x32xf32>, vector<8x32xf32>, vector<8x32xf32>, vector<8x32xf32> -> vector<56x32xf32>
    %c0_56 = arith.constant 0 : index
    %c0_57 = arith.constant 0 : index
    %264 = vector.load %arg4[%c0_56, %c0_57] : memref<32x1xf32, #tpu.memory_space<vmem>>, vector<32x1xf32>
    %cst_58 = arith.constant dense<0.000000e+00> : vector<56x1xf32>
    %265 = tpu.matmul %263, %264, %cst_58 {dimension_numbers = #tpu.dot_dimension_numbers<[1], [0], [0], [1], [0, 0, 1, 1], [], []>} : vector<56x32xf32>, vector<32x1xf32>, vector<56x1xf32> -> vector<56x1xf32>
    %c0_59 = arith.constant 0 : index
    %c0_60 = arith.constant 0 : index
    %266 = vector.load %arg5[%c0_59, %c0_60] : memref<1x1xf32, #tpu.memory_space<vmem>>, vector<1x1xf32>
    %267 = vector.broadcast %266 : vector<1x1xf32> to vector<56x1xf32>
    %268 = arith.addf %265, %267 : vector<56x1xf32>
    %c0_61 = arith.constant 0 : index
    %c0_62 = arith.constant 0 : index
    %269 = vector.load %arg6[%c0_61, %c0_62] : memref<56x1xf32, #tpu.memory_space<vmem>>, vector<56x1xf32>
    tpu.vector_store %arg6[%c0_61, %c0_62], %268 {strides = array<i32>} : memref<56x1xf32, #tpu.memory_space<vmem>>, vector<56x1xf32>,
    return
  }
}

</mosaic_0001>

<llo_original>
// kernel: lstm_model_forward.1
$region0: #{lstm_model_forward.1}
  #allocation0 [shape = 'u32[]', space=smem, size = 0x4, offset = 0x4, fixed_abs, tag = 'smem constant byte address 0x4 - core index']
  #allocation1 [shape = 'u32[144,128]{1,0:T(1,128)}', space=vmem, size = 0x12000, scoped, tag = 'internal scratch']
  #allocation2 [shape = 'f32[1,1]{1,0:T(1,128)S(1)}', space=vmem, size = 0x200, scoped, tag = 'scoped memory for lstm_model_forward.1']
  %s0 = inlined_call_operand.vmem [shape: f32[96,1], index: 0, kind: input, shape index: {}]
  %s1 = inlined_call_operand.vmem [shape: f32[1,128], index: 1, kind: input, shape index: {}]
  %s2 = inlined_call_operand.vmem [shape: f32[32,128], index: 2, kind: input, shape index: {}]
  %s3 = inlined_call_operand.vmem [shape: f32[1,128], index: 3, kind: input, shape index: {}]
  %s4 = inlined_call_operand.vmem [shape: f32[32,1], index: 4, kind: input, shape index: {}]
  %s5 = inlined_call_operand.<no memory space> [shape: f32[1,1], index: 5, kind: input, shape index: {}]
  %s6 = inlined_call_operand.vmem [shape: f32[56,1], index: 6, kind: output, shape index: {}]
  %s7 = sld [smem:[#allocation0]]
  $region34: #{lstm_model_forward.1} parent=0
    _
  %s9 = ssub.s32 1, %s7
  %s10 = scalar_select 0, %s9, %s7
  %v11 = vstv %s5
  %12 = vst [vmem:[#allocation2] sm:$0x1] %v11
  // Predicated region
  $region2: #{lstm_model_forward.1} parent=0 // pred_check
    _
  $region3: #{lstm_model_forward.1} parent=0 // pred_check_branch
    %14 = sbr.rel (0) target = $region5
  $region4: #{lstm_model_forward.1} parent=0 // pred_region
    _
  $region5: #{lstm_model_forward.1} parent=0 // pred_fallthru
    _
  // Predicated region
  $region6: #{lstm_model_forward.1} parent=0 // pred_check
    _
  $region7: #{lstm_model_forward.1} parent=0 // pred_check_branch
    %16 = sbr.rel (0) target = $region9
  $region8: #{lstm_model_forward.1} parent=0 // pred_region
    _
  $region9: #{lstm_model_forward.1} parent=0 // pred_fallthru
    _
  // Predicated region
  $region10: #{lstm_model_forward.1} parent=0 // pred_check
    _
  $region11: #{lstm_model_forward.1} parent=0 // pred_check_branch
    %18 = sbr.rel (0) target = $region13
  $region12: #{lstm_model_forward.1} parent=0 // pred_region
    _
  $region13: #{lstm_model_forward.1} parent=0 // pred_fallthru
    _
  // Predicated region
  $region14: #{lstm_model_forward.1} parent=0 // pred_check
    _
  $region15: #{lstm_model_forward.1} parent=0 // pred_check_branch
    %20 = sbr.rel (0) target = $region17
  $region16: #{lstm_model_forward.1} parent=0 // pred_region
    _
  $region17: #{lstm_model_forward.1} parent=0 // pred_fallthru
    _
  // Predicated region
  $region18: #{lstm_model_forward.1} parent=0 // pred_check
    _
  $region19: #{lstm_model_forward.1} parent=0 // pred_check_branch
    %22 = sbr.rel (0) target = $region21
  $region20: #{lstm_model_forward.1} parent=0 // pred_region
    _
  $region21: #{lstm_model_forward.1} parent=0 // pred_fallthru
    _
  // Predicated region
  $region22: #{lstm_model_forward.1} parent=0 // pred_check
    _
  $region23: #{lstm_model_forward.1} parent=0 // pred_check_branch
    %24 = sbr.rel (0) target = $region25
  $region24: #{lstm_model_forward.1} parent=0 // pred_region
    _
  $region25: #{lstm_model_forward.1} parent=0 // pred_fallthru
    _
  %v25 = vld [vmem:[%s0] sm:$0xff]
  %v26 = vld [vmem:[%s0 + $0x8] sm:$0xff]
  %v27 = vld [vmem:[%s0 + $0x10] sm:$0xff]
  %v28 = vld [vmem:[%s0 + $0x18] sm:$0xff]
  %v29 = vld [vmem:[%s0 + $0x20] sm:$0xff]
  %v30 = vld [vmem:[%s0 + $0x28] sm:$0xff]
  %v31 = vld [vmem:[%s0 + $0x30] sm:$0xff]
  %v32 = vld [vmem:[%s0 + $0x38] sm:$0xff]
  %v33 = vld [vmem:[%s0 + $0x40] sm:$0xff]
  %v34 = vld [vmem:[%s0 + $0x48] sm:$0xff]
  %v35 = vld [vmem:[%s0 + $0x50] sm:$0xff]
  %v36 = vld [vmem:[%s0 + $0x58] sm:$0xff]
  %v37 = vld [vmem:[%s1] sm:$0x1]
  %39 = vset.pattern.permute.xlu0 0
  %40 = vperm.xlu0 %39, %v25
  %v41 = vpop.permute.xlu0 %40
  %44 = vset.pattern.permute.xlu0 0
  %45 = vperm.xlu0 %44, %v26
  %v46 = vpop.permute.xlu0 %45
  %49 = vset.pattern.permute.xlu0 0
  %50 = vperm.xlu0 %49, %v27
  %v51 = vpop.permute.xlu0 %50
  %54 = vset.pattern.permute.xlu0 0
  %55 = vperm.xlu0 %54, %v28
  %v56 = vpop.permute.xlu0 %55
  %59 = vset.pattern.permute.xlu0 0
  %60 = vperm.xlu0 %59, %v29
  %v61 = vpop.permute.xlu0 %60
  %64 = vset.pattern.permute.xlu0 0
  %65 = vperm.xlu0 %64, %v30
  %v66 = vpop.permute.xlu0 %65
  %69 = vset.pattern.permute.xlu0 0
  %70 = vperm.xlu0 %69, %v31
  %v71 = vpop.permute.xlu0 %70
  %74 = vset.pattern.permute.xlu0 0
  %75 = vperm.xlu0 %74, %v32
  %v76 = vpop.permute.xlu0 %75
  %79 = vset.pattern.permute.xlu0 0
  %80 = vperm.xlu0 %79, %v33
  %v81 = vpop.permute.xlu0 %80
  %84 = vset.pattern.permute.xlu0 0
  %85 = vperm.xlu0 %84, %v34
  %v86 = vpop.permute.xlu0 %85
  %89 = vset.pattern.permute.xlu0 0
  %90 = vperm.xlu0 %89, %v35
  %v91 = vpop.permute.xlu0 %90
  %94 = vset.pattern.permute.xlu0 0
  %95 = vperm.xlu0 %94, %v36
  %v96 = vpop.permute.xlu0 %95
  %v99 = vlaneseq
  %v100 = vshrl.u32 %v99, 7
  %v101 = vsub.s32 0, %v100
  %v102 = vrot.slane %v37, %v101
  %v104 = vmul.f32 %v41, %v102
  %v105 = vmul.f32 %v46, %v102
  %v106 = vmul.f32 %v51, %v102
  %v107 = vmul.f32 %v56, %v102
  %v108 = vmul.f32 %v61, %v102
  %v109 = vmul.f32 %v66, %v102
  %v110 = vmul.f32 %v71, %v102
  %v111 = vmul.f32 %v76, %v102
  %v112 = vmul.f32 %v81, %v102
  %v113 = vmul.f32 %v86, %v102
  %v114 = vmul.f32 %v91, %v102
  %v115 = vmul.f32 %v96, %v102
  %v116 = vld [vmem:[%s3] sm:$0x1]
  %v118 = vlaneseq
  %v119 = vshrl.u32 %v118, 7
  %v120 = vsub.s32 0, %v119
  %v121 = vrot.slane %v116, %v120
  %v123 = vadd.f32 %v104, %v121
  %v124 = vadd.f32 %v105, %v121
  %v125 = vadd.f32 %v106, %v121
  %v126 = vadd.f32 %v107, %v121
  %v127 = vadd.f32 %v108, %v121
  %v128 = vadd.f32 %v109, %v121
  %v129 = vadd.f32 %v110, %v121
  %v130 = vadd.f32 %v111, %v121
  %v131 = vadd.f32 %v112, %v121
  %v132 = vadd.f32 %v113, %v121
  %v133 = vadd.f32 %v114, %v121
  %v134 = vadd.f32 %v115, %v121
  %v135 = vld [vmem:[%s2] sm:$0xff]
  %v136 = vld [vmem:[%s2 + $0x8] sm:$0xff]
  %v137 = vld [vmem:[%s2 + $0x10] sm:$0xff]
  %v138 = vld [vmem:[%s2 + $0x18] sm:$0xff]
  %vm139 = vcmask 261120
  %v141 = vsel %vm139, 0.0, 0
  %143 = vmatprep.subr.mxu0 0.0
  %144 = vmatpush1.msra.mxu0 %v135
  %145 = vmatprep.subr.mxu0 0.0
  %146 = vmatpush1.msra.mxu0 %v136
  %147 = vmatprep.subr.mxu0 0.0
  %148 = vmatpush1.msra.mxu0 %v137
  %149 = vmatprep.subr.mxu0 0.0
  %150 = vmatpush1.msra.mxu0 %v138
  %151 = vmatprep.subr.mxu0 0.0
  %152 = vmatpush1.msra.mxu0 0.0
  %153 = vmatprep.subr.mxu0 0.0
  %154 = vmatpush1.msra.mxu0 0.0
  %155 = vmatprep.subr.mxu0 0.0
  %156 = vmatpush1.msra.mxu0 0.0
  %157 = vmatprep.subr.mxu0 0.0
  %158 = vmatpush1.msra.mxu0 0.0
  %159 = vmatprep.subr.mxu0 0.0
  %160 = vmatpush1.msra.mxu0 0.0
  %161 = vmatprep.subr.mxu0 0.0
  %162 = vmatpush1.msra.mxu0 0.0
  %163 = vmatprep.subr.mxu0 0.0
  %164 = vmatpush1.msra.mxu0 0.0
  %165 = vmatprep.subr.mxu0 0.0
  %166 = vmatpush1.msra.mxu0 0.0
  %167 = vmatprep.subr.mxu0 0.0
  %168 = vmatpush1.msra.mxu0 0.0
  %169 = vmatprep.subr.mxu0 0.0
  %170 = vmatpush1.msra.mxu0 0.0
  %171 = vmatprep.subr.mxu0 0.0
  %172 = vmatpush1.msra.mxu0 0.0
  %173 = vmatprep.subr.mxu0 0.0
  %174 = vmatpush1.msra.mxu0 0.0
  %175 = vmatprep.subr.mxu0 0.0
  %176 = vmatpush1.msra.mxu0 0.0
  %177 = vmatprep.subr.mxu0 0.0
  %178 = vmatpush1.msra.mxu0 0.0
  %179 = vmatprep.subr.mxu0 0.0
  %180 = vmatpush1.msra.mxu0 0.0
  %181 = vmatprep.subr.mxu0 0.0
  %182 = vmatpush1.msra.mxu0 0.0
  %183 = vmatprep.subr.mxu0 0.0
  %184 = vmatpush1.msra.mxu0 0.0
  %185 = vmatprep.subr.mxu0 0.0
  %186 = vmatpush1.msra.mxu0 0.0
  %187 = vmatprep.subr.mxu0 0.0
  %188 = vmatpush1.msra.mxu0 0.0
  %189 = vmatprep.subr.mxu0 0.0
  %190 = vmatpush1.msra.mxu0 0.0
  %191 = vmatprep.subr.mxu0 0.0
  %192 = vmatpush1.msra.mxu0 0.0
  %193 = vmatprep.subr.mxu0 0.0
  %194 = vmatpush1.msra.mxu0 0.0
  %195 = vmatprep.subr.mxu0 0.0
  %196 = vmatpush1.msra.mxu0 0.0
  %197 = vmatprep.subr.mxu0 0.0
  %198 = vmatpush1.msra.mxu0 0.0
  %199 = vmatprep.subr.mxu0 0.0
  %200 = vmatpush1.msra.mxu0 0.0
  %201 = vmatprep.subr.mxu0 0.0
  %202 = vmatpush1.msra.mxu0 0.0
  %203 = vmatprep.subr.mxu0 0.0
  %204 = vmatpush1.msra.mxu0 0.0
  %205 = vmatprep.subr.mxu0 0.0
  %206 = vmatpush1.msra.mxu0 0.0
  %207 = vmatprep.mubr.f32.mxu0 0.0
  %208 = vmatmul.mubr.f32.gmra.mrb[0].mxu0 %v141
  %v209 = vpop.f32.mrb[0].mxu0
  %v210 = vadd.f32 0.0, %v209
  %v211 = vpop.f32.mrb[0].mxu0
  %212 = vdwg.mxu0
  %v213 = vadd.f32 %v123, %v210
  %v214 = vxor.u32 %v213, 2147483648
  %v215 = vmul.f32 %v214, 1.442695
  %v216 = vpow.pop %v215
  %v217 = vadd.f32 %v216, 1.0
  %v218 = vrcp.pop %v217
  %v219 = vmul.f32 1.0, %v218
  %v220 = vmul.f32 %v219, 2.0
  %v221 = vsub.f32 %v220, 1.0
  %v222 = vmul.f32 %v219, 0.0
  %224 = vrot.lane.b32.xlu0 %v221, 64
  %v225 = vpop.permute.xlu0 %224
  %v227 = vmul.f32 %v219, %v225
  %229 = vrot.lane.b32.xlu0 %v227, 32
  %v230 = vpop.permute.xlu0 %229
  %v232 = vadd.f32 %v222, %v230
  %v233 = vtanh.pop %v232
  %235 = vrot.lane.b32.xlu0 %v233, 64
  %v236 = vpop.permute.xlu0 %235
  %v238 = vmul.f32 %v219, %v236
  %240 = vrot.lane.b32.xlu0 %v238, 32
  %v241 = vpop.permute.xlu0 %240
  %v242 = vsel %vm139, %v241, 0
  %244 = vmatprep.subr.mxu0 0.0
  %245 = vmatpush1.msra.mxu0 %v135
  %246 = vmatprep.subr.mxu0 0.0
  %247 = vmatpush1.msra.mxu0 %v136
  %248 = vmatprep.subr.mxu0 0.0
  %249 = vmatpush1.msra.mxu0 %v137
  %250 = vmatprep.subr.mxu0 0.0
  %251 = vmatpush1.msra.mxu0 %v138
  %252 = vmatprep.subr.mxu0 0.0
  %253 = vmatpush1.msra.mxu0 0.0
  %254 = vmatprep.subr.mxu0 0.0
  %255 = vmatpush1.msra.mxu0 0.0
  %256 = vmatprep.subr.mxu0 0.0
  %257 = vmatpush1.msra.mxu0 0.0
  %258 = vmatprep.subr.mxu0 0.0
  %259 = vmatpush1.msra.mxu0 0.0
  %260 = vmatprep.subr.mxu0 0.0
  %261 = vmatpush1.msra.mxu0 0.0
  %262 = vmatprep.subr.mxu0 0.0
  %263 = vmatpush1.msra.mxu0 0.0
  %264 = vmatprep.subr.mxu0 0.0
  %265 = vmatpush1.msra.mxu0 0.0
  %266 = vmatprep.subr.mxu0 0.0
  %267 = vmatpush1.msra.mxu0 0.0
  %268 = vmatprep.subr.mxu0 0.0
  %269 = vmatpush1.msra.mxu0 0.0
  %270 = vmatprep.subr.mxu0 0.0
  %271 = vmatpush1.msra.mxu0 0.0
  %272 = vmatprep.subr.mxu0 0.0
  %273 = vmatpush1.msra.mxu0 0.0
  %274 = vmatprep.subr.mxu0 0.0
  %275 = vmatpush1.msra.mxu0 0.0
  %276 = vmatprep.subr.mxu0 0.0
  %277 = vmatpush1.msra.mxu0 0.0
  %278 = vmatprep.subr.mxu0 0.0
  %279 = vmatpush1.msra.mxu0 0.0
  %280 = vmatprep.subr.mxu0 0.0
  %281 = vmatpush1.msra.mxu0 0.0
  %282 = vmatprep.subr.mxu0 0.0
  %283 = vmatpush1.msra.mxu0 0.0
  %284 = vmatprep.subr.mxu0 0.0
  %285 = vmatpush1.msra.mxu0 0.0
  %286 = vmatprep.subr.mxu0 0.0
  %287 = vmatpush1.msra.mxu0 0.0
  %288 = vmatprep.subr.mxu0 0.0
  %289 = vmatpush1.msra.mxu0 0.0
  %290 = vmatprep.subr.mxu0 0.0
  %291 = vmatpush1.msra.mxu0 0.0
  %292 = vmatprep.subr.mxu0 0.0
  %293 = vmatpush1.msra.mxu0 0.0
  %294 = vmatprep.subr.mxu0 0.0
  %295 = vmatpush1.msra.mxu0 0.0
  %296 = vmatprep.subr.mxu0 0.0
  %297 = vmatpush1.msra.mxu0 0.0
  %298 = vmatprep.subr.mxu0 0.0
  %299 = vmatpush1.msra.mxu0 0.0
  %300 = vmatprep.subr.mxu0 0.0
  %301 = vmatpush1.msra.mxu0 0.0
  %302 = vmatprep.subr.mxu0 0.0
  %303 = vmatpush1.msra.mxu0 0.0
  %304 = vmatprep.subr.mxu0 0.0
  %305 = vmatpush1.msra.mxu0 0.0
  %306 = vmatprep.subr.mxu0 0.0
  %307 = vmatpush1.msra.mxu0 0.0
  %308 = vmatprep.mubr.f32.mxu0 0.0
  %309 = vmatmul.mubr.f32.gmra.mrb[0].mxu0 %v242
  %v310 = vpop.f32.mrb[0].mxu0
  %v311 = vadd.f32 0.0, %v310
  %v312 = vpop.f32.mrb[0].mxu0
  %313 = vdwg.mxu0
  %v314 = vadd.f32 %v124, %v311
  %v315 = vxor.u32 %v314, 2147483648
  %v316 = vmul.f32 %v315, 1.442695
  %v317 = vpow.pop %v316
  %v318 = vadd.f32 %v317, 1.0
  %v319 = vrcp.pop %v318
  %v320 = vmul.f32 1.0, %v319
  %v321 = vmul.f32 %v320, 2.0
  %v322 = vsub.f32 %v321, 1.0
  %v323 = vmul.f32 %v320, %v232
  %325 = vrot.lane.b32.xlu0 %v322, 64
  %v326 = vpop.permute.xlu0 %325
  %v328 = vmul.f32 %v320, %v326
  %330 = vrot.lane.b32.xlu0 %v328, 32
  %v331 = vpop.permute.xlu0 %330
  %v333 = vadd.f32 %v323, %v331
  %v334 = vtanh.pop %v333
  %336 = vrot.lane.b32.xlu0 %v334, 64
  %v337 = vpop.permute.xlu0 %336
  %v339 = vmul.f32 %v320, %v337
  %341 = vrot.lane.b32.xlu0 %v339, 32
  %v342 = vpop.permute.xlu0 %341
  %v343 = vsel %vm139, %v342, 0
  %345 = vmatprep.subr.mxu0 0.0
  %346 = vmatpush1.msra.mxu0 %v135
  %347 = vmatprep.subr.mxu0 0.0
  %348 = vmatpush1.msra.mxu0 %v136
  %349 = vmatprep.subr.mxu0 0.0
  %350 = vmatpush1.msra.mxu0 %v137
  %351 = vmatprep.subr.mxu0 0.0
  %352 = vmatpush1.msra.mxu0 %v138
  %353 = vmatprep.subr.mxu0 0.0
  %354 = vmatpush1.msra.mxu0 0.0
  %355 = vmatprep.subr.mxu0 0.0
  %356 = vmatpush1.msra.mxu0 0.0
  %357 = vmatprep.subr.mxu0 0.0
  %358 = vmatpush1.msra.mxu0 0.0
  %359 = vmatprep.subr.mxu0 0.0
  %360 = vmatpush1.msra.mxu0 0.0
  %361 = vmatprep.subr.mxu0 0.0
  %362 = vmatpush1.msra.mxu0 0.0
  %363 = vmatprep.subr.mxu0 0.0
  %364 = vmatpush1.msra.mxu0 0.0
  %365 = vmatprep.subr.mxu0 0.0
  %366 = vmatpush1.msra.mxu0 0.0
  %367 = vmatprep.subr.mxu0 0.0
  %368 = vmatpush1.msra.mxu0 0.0
  %369 = vmatprep.subr.mxu0 0.0
  %370 = vmatpush1.msra.mxu0 0.0
  %371 = vmatprep.subr.mxu0 0.0
  %372 = vmatpush1.msra.mxu0 0.0
  %373 = vmatprep.subr.mxu0 0.0
  %374 = vmatpush1.msra.mxu0 0.0
  %375 = vmatprep.subr.mxu0 0.0
  %376 = vmatpush1.msra.mxu0 0.0
  %377 = vmatprep.subr.mxu0 0.0
  %378 = vmatpush1.msra.mxu0 0.0
  %379 = vmatprep.subr.mxu0 0.0
  %380 = vmatpush1.msra.mxu0 0.0
  %381 = vmatprep.subr.mxu0 0.0
  %382 = vmatpush1.msra.mxu0 0.0
  %383 = vmatprep.subr.mxu0 0.0
  %384 = vmatpush1.msra.mxu0 0.0
  %385 = vmatprep.subr.mxu0 0.0
  %386 = vmatpush1.msra.mxu0 0.0
  %387 = vmatprep.subr.mxu0 0.0
  %388 = vmatpush1.msra.mxu0 0.0
  %389 = vmatprep.subr.mxu0 0.0
  %390 = vmatpush1.msra.mxu0 0.0
  %391 = vmatprep.subr.mxu0 0.0
  %392 = vmatpush1.msra.mxu0 0.0
  %393 = vmatprep.subr.mxu0 0.0
  %394 = vmatpush1.msra.mxu0 0.0
  %395 = vmatprep.subr.mxu0 0.0
  %396 = vmatpush1.msra.mxu0 0.0
  %397 = vmatprep.subr.mxu0 0.0
  %398 = vmatpush1.msra.mxu0 0.0
  %399 = vmatprep.subr.mxu0 0.0
  %400 = vmatpush1.msra.mxu0 0.0
  %401 = vmatprep.subr.mxu0 0.0
  %402 = vmatpush1.msra.mxu0 0.0
  %403 = vmatprep.subr.mxu0 0.0
  %404 = vmatpush1.msra.mxu0 0.0
  %405 = vmatprep.subr.mxu0 0.0
  %406 = vmatpush1.msra.mxu0 0.0
  %407 = vmatprep.subr.mxu0 0.0
  %408 = vmatpush1.msra.mxu0 0.0
  %409 = vmatprep.mubr.f32.mxu0 0.0
  %410 = vmatmul.mubr.f32.gmra.mrb[0].mxu0 %v343
  %v411 = vpop.f32.mrb[0].mxu0
  %v412 = vadd.f32 0.0, %v411
  %v413 = vpop.f32.mrb[0].mxu0
  %414 = vdwg.mxu0
  %v415 = vadd.f32 %v125, %v412
  %v416 = vxor.u32 %v415, 2147483648
  %v417 = vmul.f32 %v416, 1.442695
  %v418 = vpow.pop %v417
  %v419 = vadd.f32 %v418, 1.0
  %v420 = vrcp.pop %v419
  %v421 = vmul.f32 1.0, %v420
  %v422 = vmul.f32 %v421, 2.0
  %v423 = vsub.f32 %v422, 1.0
  %v424 = vmul.f32 %v421, %v333
  %426 = vrot.lane.b32.xlu0 %v423, 64
  %v427 = vpop.permute.xlu0 %426
  %v429 = vmul.f32 %v421, %v427
  %431 = vrot.lane.b32.xlu0 %v429, 32
  %v432 = vpop.permute.xlu0 %431
  %v434 = vadd.f32 %v424, %v432
  %v435 = vtanh.pop %v434
  %437 = vrot.lane.b32.xlu0 %v435, 64
  %v438 = vpop.permute.xlu0 %437
  %v440 = vmul.f32 %v421, %v438
  %442 = vrot.lane.b32.xlu0 %v440, 32
  %v443 = vpop.permute.xlu0 %442
  %v444 = vsel %vm139, %v443, 0
  %446 = vmatprep.subr.mxu0 0.0
  %447 = vmatpush1.msra.mxu0 %v135
  %448 = vmatprep.subr.mxu0 0.0
  %449 = vmatpush1.msra.mxu0 %v136
  %450 = vmatprep.subr.mxu0 0.0
  %451 = vmatpush1.msra.mxu0 %v137
  %452 = vmatprep.subr.mxu0 0.0
  %453 = vmatpush1.msra.mxu0 %v138
  %454 = vmatprep.subr.mxu0 0.0
  %455 = vmatpush1.msra.mxu0 0.0
  %456 = vmatprep.subr.mxu0 0.0
  %457 = vmatpush1.msra.mxu0 0.0
  %458 = vmatprep.subr.mxu0 0.0
  %459 = vmatpush1.msra.mxu0 0.0
  %460 = vmatprep.subr.mxu0 0.0
  %461 = vmatpush1.msra.mxu0 0.0
  %462 = vmatprep.subr.mxu0 0.0
  %463 = vmatpush1.msra.mxu0 0.0
  %464 = vmatprep.subr.mxu0 0.0
  %465 = vmatpush1.msra.mxu0 0.0
  %466 = vmatprep.subr.mxu0 0.0
  %467 = vmatpush1.msra.mxu0 0.0
  %468 = vmatprep.subr.mxu0 0.0
  %469 = vmatpush1.msra.mxu0 0.0
  %470 = vmatprep.subr.mxu0 0.0
  %471 = vmatpush1.msra.mxu0 0.0
  %472 = vmatprep.subr.mxu0 0.0
  %473 = vmatpush1.msra.mxu0 0.0
  %474 = vmatprep.subr.mxu0 0.0
  %475 = vmatpush1.msra.mxu0 0.0
  %476 = vmatprep.subr.mxu0 0.0
  %477 = vmatpush1.msra.mxu0 0.0
  %478 = vmatprep.subr.mxu0 0.0
  %479 = vmatpush1.msra.mxu0 0.0
  %480 = vmatprep.subr.mxu0 0.0
  %481 = vmatpush1.msra.mxu0 0.0
  %482 = vmatprep.subr.mxu0 0.0
  %483 = vmatpush1.msra.mxu0 0.0
  %484 = vmatprep.subr.mxu0 0.0
  %485 = vmatpush1.msra.mxu0 0.0
  %486 = vmatprep.subr.mxu0 0.0
  %487 = vmatpush1.msra.mxu0 0.0
  %488 = vmatprep.subr.mxu0 0.0
  %489 = vmatpush1.msra.mxu0 0.0
  %490 = vmatprep.subr.mxu0 0.0
  %491 = vmatpush1.msra.mxu0 0.0
  %492 = vmatprep.subr.mxu0 0.0
  %493 = vmatpush1.msra.mxu0 0.0
  %494 = vmatprep.subr.mxu0 0.0
  %495 = vmatpush1.msra.mxu0 0.0
  %496 = vmatprep.subr.mxu0 0.0
  %497 = vmatpush1.msra.mxu0 0.0
  %498 = vmatprep.subr.mxu0 0.0
  %499 = vmatpush1.msra.mxu0 0.0
  %500 = vmatprep.subr.mxu0 0.0
  %501 = vmatpush1.msra.mxu0 0.0
  %502 = vmatprep.subr.mxu0 0.0
  %503 = vmatpush1.msra.mxu0 0.0
  %504 = vmatprep.subr.mxu0 0.0
  %505 = vmatpush1.msra.mxu0 0.0
  %506 = vmatprep.subr.mxu0 0.0
  %507 = vmatpush1.msra.mxu0 0.0
  %508 = vmatprep.subr.mxu0 0.0
  %509 = vmatpush1.msra.mxu0 0.0
  %510 = vmatprep.mubr.f32.mxu0 0.0
  %511 = vmatmul.mubr.f32.gmra.mrb[0].mxu0 %v444
  %v512 = vpop.f32.mrb[0].mxu0
  %v513 = vadd.f32 0.0, %v512
  %v514 = vpop.f32.mrb[0].mxu0
  %515 = vdwg.mxu0
  %v516 = vadd.f32 %v126, %v513
  %v517 = vxor.u32 %v516, 2147483648
  %v518 = vmul.f32 %v517, 1.442695
  %v519 = vpow.pop %v518
  %v520 = vadd.f32 %v519, 1.0
  %v521 = vrcp.pop %v520
  %v522 = vmul.f32 1.0, %v521
  %v523 = vmul.f32 %v522, 2.0
  %v524 = vsub.f32 %v523, 1.0
  %v525 = vmul.f32 %v522, %v434
  %527 = vrot.lane.b32.xlu0 %v524, 64
  %v528 = vpop.permute.xlu0 %527
  %v530 = vmul.f32 %v522, %v528
  %532 = vrot.lane.b32.xlu0 %v530, 32
  %v533 = vpop.permute.xlu0 %532
  %v535 = vadd.f32 %v525, %v533
  %v536 = vtanh.pop %v535
  %538 = vrot.lane.b32.xlu0 %v536, 64
  %v539 = vpop.permute.xlu0 %538
  %v541 = vmul.f32 %v522, %v539
  %543 = vrot.lane.b32.xlu0 %v541, 32
  %v544 = vpop.permute.xlu0 %543
  %v545 = vsel %vm139, %v544, 0
  %547 = vmatprep.subr.mxu0 0.0
  %548 = vmatpush1.msra.mxu0 %v135
  %549 = vmatprep.subr.mxu0 0.0
  %550 = vmatpush1.msra.mxu0 %v136
  %551 = vmatprep.subr.mxu0 0.0
  %552 = vmatpush1.msra.mxu0 %v137
  %553 = vmatprep.subr.mxu0 0.0
  %554 = vmatpush1.msra.mxu0 %v138
  %555 = vmatprep.subr.mxu0 0.0
  %556 = vmatpush1.msra.mxu0 0.0
  %557 = vmatprep.subr.mxu0 0.0
  %558 = vmatpush1.msra.mxu0 0.0
  %559 = vmatprep.subr.mxu0 0.0
  %560 = vmatpush1.msra.mxu0 0.0
  %561 = vmatprep.subr.mxu0 0.0
  %562 = vmatpush1.msra.mxu0 0.0
  %563 = vmatprep.subr.mxu0 0.0
  %564 = vmatpush1.msra.mxu0 0.0
  %565 = vmatprep.subr.mxu0 0.0
  %566 = vmatpush1.msra.mxu0 0.0
  %567 = vmatprep.subr.mxu0 0.0
  %568 = vmatpush1.msra.mxu0 0.0
  %569 = vmatprep.subr.mxu0 0.0
  %570 = vmatpush1.msra.mxu0 0.0
  %571 = vmatprep.subr.mxu0 0.0
  %572 = vmatpush1.msra.mxu0 0.0
  %573 = vmatprep.subr.mxu0 0.0
  %574 = vmatpush1.msra.mxu0 0.0
  %575 = vmatprep.subr.mxu0 0.0
  %576 = vmatpush1.msra.mxu0 0.0
  %577 = vmatprep.subr.mxu0 0.0
  %578 = vmatpush1.msra.mxu0 0.0
  %579 = vmatprep.subr.mxu0 0.0
  %580 = vmatpush1.msra.mxu0 0.0
  %581 = vmatprep.subr.mxu0 0.0
  %582 = vmatpush1.msra.mxu0 0.0
  %583 = vmatprep.subr.mxu0 0.0
  %584 = vmatpush1.msra.mxu0 0.0
  %585 = vmatprep.subr.mxu0 0.0
  %586 = vmatpush1.msra.mxu0 0.0
  %587 = vmatprep.subr.mxu0 0.0
  %588 = vmatpush1.msra.mxu0 0.0
  %589 = vmatprep.subr.mxu0 0.0
  %590 = vmatpush1.msra.mxu0 0.0
  %591 = vmatprep.subr.mxu0 0.0
  %592 = vmatpush1.msra.mxu0 0.0
  %593 = vmatprep.subr.mxu0 0.0
  %594 = vmatpush1.msra.mxu0 0.0
  %595 = vmatprep.subr.mxu0 0.0
  %596 = vmatpush1.msra.mxu0 0.0
  %597 = vmatprep.subr.mxu0 0.0
  %598 = vmatpush1.msra.mxu0 0.0
  %599 = vmatprep.subr.mxu0 0.0
  %600 = vmatpush1.msra.mxu0 0.0
  %601 = vmatprep.subr.mxu0 0.0
  %602 = vmatpush1.msra.mxu0 0.0
  %603 = vmatprep.subr.mxu0 0.0
  %604 = vmatpush1.msra.mxu0 0.0
  %605 = vmatprep.subr.mxu0 0.0
  %606 = vmatpush1.msra.mxu0 0.0
  %607 = vmatprep.subr.mxu0 0.0
  %608 = vmatpush1.msra.mxu0 0.0
  %609 = vmatprep.subr.mxu0 0.0
  %610 = vmatpush1.msra.mxu0 0.0
  %611 = vmatprep.mubr.f32.mxu0 0.0
  %612 = vmatmul.mubr.f32.gmra.mrb[0].mxu0 %v545
  %v613 = vpop.f32.mrb[0].mxu0
  %v614 = vadd.f32 0.0, %v613
  %v615 = vpop.f32.mrb[0].mxu0
  %616 = vdwg.mxu0
  %v617 = vadd.f32 %v127, %v614
  %v618 = vxor.u32 %v617, 2147483648
  %v619 = vmul.f32 %v618, 1.442695
  %v620 = vpow.pop %v619
  %v621 = vadd.f32 %v620, 1.0
  %v622 = vrcp.pop %v621
  %v623 = vmul.f32 1.0, %v622
  %v624 = vmul.f32 %v623, 2.0
  %v625 = vsub.f32 %v624, 1.0
  %v626 = vmul.f32 %v623, %v535
  %628 = vrot.lane.b32.xlu0 %v625, 64
  %v629 = vpop.permute.xlu0 %628
  %v631 = vmul.f32 %v623, %v629
  %633 = vrot.lane.b32.xlu0 %v631, 32
  %v634 = vpop.permute.xlu0 %633
  %v636 = vadd.f32 %v626, %v634
  %v637 = vtanh.pop %v636
  %639 = vrot.lane.b32.xlu0 %v637, 64
  %v640 = vpop.permute.xlu0 %639
  %v642 = vmul.f32 %v623, %v640
  %644 = vrot.lane.b32.xlu0 %v642, 32
  %v645 = vpop.permute.xlu0 %644
  %v646 = vsel %vm139, %v645, 0
  %648 = vmatprep.subr.mxu0 0.0
  %649 = vmatpush1.msra.mxu0 %v135
  %650 = vmatprep.subr.mxu0 0.0
  %651 = vmatpush1.msra.mxu0 %v136
  %652 = vmatprep.subr.mxu0 0.0
  %653 = vmatpush1.msra.mxu0 %v137
  %654 = vmatprep.subr.mxu0 0.0
  %655 = vmatpush1.msra.mxu0 %v138
  %656 = vmatprep.subr.mxu0 0.0
  %657 = vmatpush1.msra.mxu0 0.0
  %658 = vmatprep.subr.mxu0 0.0
  %659 = vmatpush1.msra.mxu0 0.0
  %660 = vmatprep.subr.mxu0 0.0
  %661 = vmatpush1.msra.mxu0 0.0
  %662 = vmatprep.subr.mxu0 0.0
  %663 = vmatpush1.msra.mxu0 0.0
  %664 = vmatprep.subr.mxu0 0.0
  %665 = vmatpush1.msra.mxu0 0.0
  %666 = vmatprep.subr.mxu0 0.0
  %667 = vmatpush1.msra.mxu0 0.0
  %668 = vmatprep.subr.mxu0 0.0
  %669 = vmatpush1.msra.mxu0 0.0
  %670 = vmatprep.subr.mxu0 0.0
  %671 = vmatpush1.msra.mxu0 0.0
  %672 = vmatprep.subr.mxu0 0.0
  %673 = vmatpush1.msra.mxu0 0.0
  %674 = vmatprep.subr.mxu0 0.0
  %675 = vmatpush1.msra.mxu0 0.0
  %676 = vmatprep.subr.mxu0 0.0
  %677 = vmatpush1.msra.mxu0 0.0
  %678 = vmatprep.subr.mxu0 0.0
  %679 = vmatpush1.msra.mxu0 0.0
  %680 = vmatprep.subr.mxu0 0.0
  %681 = vmatpush1.msra.mxu0 0.0
  %682 = vmatprep.subr.mxu0 0.0
  %683 = vmatpush1.msra.mxu0 0.0
  %684 = vmatprep.subr.mxu0 0.0
  %685 = vmatpush1.msra.mxu0 0.0
  %686 = vmatprep.subr.mxu0 0.0
  %687 = vmatpush1.msra.mxu0 0.0
  %688 = vmatprep.subr.mxu0 0.0
  %689 = vmatpush1.msra.mxu0 0.0
  %690 = vmatprep.subr.mxu0 0.0
  %691 = vmatpush1.msra.mxu0 0.0
  %692 = vmatprep.subr.mxu0 0.0
  %693 = vmatpush1.msra.mxu0 0.0
  %694 = vmatprep.subr.mxu0 0.0
  %695 = vmatpush1.msra.mxu0 0.0
  %696 = vmatprep.subr.mxu0 0.0
  %697 = vmatpush1.msra.mxu0 0.0
  %698 = vmatprep.subr.mxu0 0.0
  %699 = vmatpush1.msra.mxu0 0.0
  %700 = vmatprep.subr.mxu0 0.0
  %701 = vmatpush1.msra.mxu0 0.0
  %702 = vmatprep.subr.mxu0 0.0
  %703 = vmatpush1.msra.mxu0 0.0
  %704 = vmatprep.subr.mxu0 0.0
  %705 = vmatpush1.msra.mxu0 0.0
  %706 = vmatprep.subr.mxu0 0.0
  %707 = vmatpush1.msra.mxu0 0.0
  %708 = vmatprep.subr.mxu0 0.0
  %709 = vmatpush1.msra.mxu0 0.0
  %710 = vmatprep.subr.mxu0 0.0
  %711 = vmatpush1.msra.mxu0 0.0
  %712 = vmatprep.mubr.f32.mxu0 0.0
  %713 = vmatmul.mubr.f32.gmra.mrb[0].mxu0 %v646
  %v714 = vpop.f32.mrb[0].mxu0
  %v715 = vadd.f32 0.0, %v714
  %v716 = vpop.f32.mrb[0].mxu0
  %717 = vdwg.mxu0
  %v718 = vadd.f32 %v128, %v715
  %v719 = vxor.u32 %v718, 2147483648
  %v720 = vmul.f32 %v719, 1.442695
  %v721 = vpow.pop %v720
  %v722 = vadd.f32 %v721, 1.0
  %v723 = vrcp.pop %v722
  %v724 = vmul.f32 1.0, %v723
  %v725 = vmul.f32 %v724, 2.0
  %v726 = vsub.f32 %v725, 1.0
  %v727 = vmul.f32 %v724, %v636
  %729 = vrot.lane.b32.xlu0 %v726, 64
  %v730 = vpop.permute.xlu0 %729
  %v732 = vmul.f32 %v724, %v730
  %734 = vrot.lane.b32.xlu0 %v732, 32
  %v735 = vpop.permute.xlu0 %734
  %v737 = vadd.f32 %v727, %v735
  %v738 = vtanh.pop %v737
  %740 = vrot.lane.b32.xlu0 %v738, 64
  %v741 = vpop.permute.xlu0 %740
  %v743 = vmul.f32 %v724, %v741
  %745 = vrot.lane.b32.xlu0 %v743, 32
  %v746 = vpop.permute.xlu0 %745
  %v747 = vsel %vm139, %v746, 0
  %749 = vmatprep.subr.mxu0 0.0
  %750 = vmatpush1.msra.mxu0 %v135
  %751 = vmatprep.subr.mxu0 0.0
  %752 = vmatpush1.msra.mxu0 %v136
  %753 = vmatprep.subr.mxu0 0.0
  %754 = vmatpush1.msra.mxu0 %v137
  %755 = vmatprep.subr.mxu0 0.0
  %756 = vmatpush1.msra.mxu0 %v138
  %757 = vmatprep.subr.mxu0 0.0
  %758 = vmatpush1.msra.mxu0 0.0
  %759 = vmatprep.subr.mxu0 0.0
  %760 = vmatpush1.msra.mxu0 0.0
  %761 = vmatprep.subr.mxu0 0.0
  %762 = vmatpush1.msra.mxu0 0.0
  %763 = vmatprep.subr.mxu0 0.0
  %764 = vmatpush1.msra.mxu0 0.0
  %765 = vmatprep.subr.mxu0 0.0
  %766 = vmatpush1.msra.mxu0 0.0
  %767 = vmatprep.subr.mxu0 0.0
  %768 = vmatpush1.msra.mxu0 0.0
  %769 = vmatprep.subr.mxu0 0.0
  %770 = vmatpush1.msra.mxu0 0.0
  %771 = vmatprep.subr.mxu0 0.0
  %772 = vmatpush1.msra.mxu0 0.0
  %773 = vmatprep.subr.mxu0 0.0
  %774 = vmatpush1.msra.mxu0 0.0
  %775 = vmatprep.subr.mxu0 0.0
  %776 = vmatpush1.msra.mxu0 0.0
  %777 = vmatprep.subr.mxu0 0.0
  %778 = vmatpush1.msra.mxu0 0.0
  %779 = vmatprep.subr.mxu0 0.0
  %780 = vmatpush1.msra.mxu0 0.0
  %781 = vmatprep.subr.mxu0 0.0
  %782 = vmatpush1.msra.mxu0 0.0
  %783 = vmatprep.subr.mxu0 0.0
  %784 = vmatpush1.msra.mxu0 0.0
  %785 = vmatprep.subr.mxu0 0.0
  %786 = vmatpush1.msra.mxu0 0.0
  %787 = vmatprep.subr.mxu0 0.0
  %788 = vmatpush1.msra.mxu0 0.0
  %789 = vmatprep.subr.mxu0 0.0
  %790 = vmatpush1.msra.mxu0 0.0
  %791 = vmatprep.subr.mxu0 0.0
  %792 = vmatpush1.msra.mxu0 0.0
  %793 = vmatprep.subr.mxu0 0.0
  %794 = vmatpush1.msra.mxu0 0.0
  %795 = vmatprep.subr.mxu0 0.0
  %796 = vmatpush1.msra.mxu0 0.0
  %797 = vmatprep.subr.mxu0 0.0
  %798 = vmatpush1.msra.mxu0 0.0
  %799 = vmatprep.subr.mxu0 0.0
  %800 = vmatpush1.msra.mxu0 0.0
  %801 = vmatprep.subr.mxu0 0.0
  %802 = vmatpush1.msra.mxu0 0.0
  %803 = vmatprep.subr.mxu0 0.0
  %804 = vmatpush1.msra.mxu0 0.0
  %805 = vmatprep.subr.mxu0 0.0
  %806 = vmatpush1.msra.mxu0 0.0
  %807 = vmatprep.subr.mxu0 0.0
  %808 = vmatpush1.msra.mxu0 0.0
  %809 = vmatprep.subr.mxu0 0.0
  %810 = vmatpush1.msra.mxu0 0.0
  %811 = vmatprep.subr.mxu0 0.0
  %812 = vmatpush1.msra.mxu0 0.0
  %813 = vmatprep.mubr.f32.mxu0 0.0
  %814 = vmatmul.mubr.f32.gmra.mrb[0].mxu0 %v747
  %v815 = vpop.f32.mrb[0].mxu0
  %v816 = vadd.f32 0.0, %v815
  %v817 = vpop.f32.mrb[0].mxu0
  %818 = vdwg.mxu0
  %v819 = vadd.f32 %v129, %v816
  %v820 = vxor.u32 %v819, 2147483648
  %v821 = vmul.f32 %v820, 1.442695
  %v822 = vpow.pop %v821
  %v823 = vadd.f32 %v822, 1.0
  %v824 = vrcp.pop %v823
  %v825 = vmul.f32 1.0, %v824
  %v826 = vmul.f32 %v825, 2.0
  %v827 = vsub.f32 %v826, 1.0
  %v828 = vmul.f32 %v825, %v737
  %830 = vrot.lane.b32.xlu0 %v827, 64
  %v831 = vpop.permute.xlu0 %830
  %v833 = vmul.f32 %v825, %v831
  %835 = vrot.lane.b32.xlu0 %v833, 32
  %v836 = vpop.permute.xlu0 %835
  %v838 = vadd.f32 %v828, %v836
  %v839 = vtanh.pop %v838
  %841 = vrot.lane.b32.xlu0 %v839, 64
  %v842 = vpop.permute.xlu0 %841
  %v844 = vmul.f32 %v825, %v842
  %846 = vrot.lane.b32.xlu0 %v844, 32
  %v847 = vpop.permute.xlu0 %846
  %v848 = vsel %vm139, %v847, 0
  %850 = vmatprep.subr.mxu0 0.0
  %851 = vmatpush1.msra.mxu0 %v135
  %852 = vmatprep.subr.mxu0 0.0
  %853 = vmatpush1.msra.mxu0 %v136
  %854 = vmatprep.subr.mxu0 0.0
  %855 = vmatpush1.msra.mxu0 %v137
  %856 = vmatprep.subr.mxu0 0.0
  %857 = vmatpush1.msra.mxu0 %v138
  %858 = vmatprep.subr.mxu0 0.0
  %859 = vmatpush1.msra.mxu0 0.0
  %860 = vmatprep.subr.mxu0 0.0
  %861 = vmatpush1.msra.mxu0 0.0
  %862 = vmatprep.subr.mxu0 0.0
  %863 = vmatpush1.msra.mxu0 0.0
  %864 = vmatprep.subr.mxu0 0.0
  %865 = vmatpush1.msra.mxu0 0.0
  %866 = vmatprep.subr.mxu0 0.0
  %867 = vmatpush1.msra.mxu0 0.0
  %868 = vmatprep.subr.mxu0 0.0
  %869 = vmatpush1.msra.mxu0 0.0
  %870 = vmatprep.subr.mxu0 0.0
  %871 = vmatpush1.msra.mxu0 0.0
  %872 = vmatprep.subr.mxu0 0.0
  %873 = vmatpush1.msra.mxu0 0.0
  %874 = vmatprep.subr.mxu0 0.0
  %875 = vmatpush1.msra.mxu0 0.0
  %876 = vmatprep.subr.mxu0 0.0
  %877 = vmatpush1.msra.mxu0 0.0
  %878 = vmatprep.subr.mxu0 0.0
  %879 = vmatpush1.msra.mxu0 0.0
  %880 = vmatprep.subr.mxu0 0.0
  %881 = vmatpush1.msra.mxu0 0.0
  %882 = vmatprep.subr.mxu0 0.0
  %883 = vmatpush1.msra.mxu0 0.0
  %884 = vmatprep.subr.mxu0 0.0
  %885 = vmatpush1.msra.mxu0 0.0
  %886 = vmatprep.subr.mxu0 0.0
  %887 = vmatpush1.msra.mxu0 0.0
  %888 = vmatprep.subr.mxu0 0.0
  %889 = vmatpush1.msra.mxu0 0.0
  %890 = vmatprep.subr.mxu0 0.0
  %891 = vmatpush1.msra.mxu0 0.0
  %892 = vmatprep.subr.mxu0 0.0
  %893 = vmatpush1.msra.mxu0 0.0
  %894 = vmatprep.subr.mxu0 0.0
  %895 = vmatpush1.msra.mxu0 0.0
  %896 = vmatprep.subr.mxu0 0.0
  %897 = vmatpush1.msra.mxu0 0.0
  %898 = vmatprep.subr.mxu0 0.0
  %899 = vmatpush1.msra.mxu0 0.0
  %900 = vmatprep.subr.mxu0 0.0
  %901 = vmatpush1.msra.mxu0 0.0
  %902 = vmatprep.subr.mxu0 0.0
  %903 = vmatpush1.msra.mxu0 0.0
  %904 = vmatprep.subr.mxu0 0.0
  %905 = vmatpush1.msra.mxu0 0.0
  %906 = vmatprep.subr.mxu0 0.0
  %907 = vmatpush1.msra.mxu0 0.0
  %908 = vmatprep.subr.mxu0 0.0
  %909 = vmatpush1.msra.mxu0 0.0
  %910 = vmatprep.subr.mxu0 0.0
  %911 = vmatpush1.msra.mxu0 0.0
  %912 = vmatprep.subr.mxu0 0.0
  %913 = vmatpush1.msra.mxu0 0.0
  %914 = vmatprep.mubr.f32.mxu0 0.0
  %915 = vmatmul.mubr.f32.gmra.mrb[0].mxu0 %v848
  %v916 = vpop.f32.mrb[0].mxu0
  %v917 = vadd.f32 0.0, %v916
  %v918 = vpop.f32.mrb[0].mxu0
  %919 = vdwg.mxu0
  %v920 = vadd.f32 %v130, %v917
  %v921 = vxor.u32 %v920, 2147483648
  %v922 = vmul.f32 %v921, 1.442695
  %v923 = vpow.pop %v922
  %v924 = vadd.f32 %v923, 1.0
  %v925 = vrcp.pop %v924
  %v926 = vmul.f32 1.0, %v925
  %v927 = vmul.f32 %v926, 2.0
  %v928 = vsub.f32 %v927, 1.0
  %v929 = vmul.f32 %v926, %v838
  %931 = vrot.lane.b32.xlu0 %v928, 64
  %v932 = vpop.permute.xlu0 %931
  %v934 = vmul.f32 %v926, %v932
  %936 = vrot.lane.b32.xlu0 %v934, 32
  %v937 = vpop.permute.xlu0 %936
  %v939 = vadd.f32 %v929, %v937
  %v940 = vtanh.pop %v939
  %942 = vrot.lane.b32.xlu0 %v940, 64
  %v943 = vpop.permute.xlu0 %942
  %v945 = vmul.f32 %v926, %v943
  %947 = vrot.lane.b32.xlu0 %v945, 32
  %v948 = vpop.permute.xlu0 %947
  %v949 = vsel %vm139, %v948, 0
  %951 = vmatprep.subr.mxu0 0.0
  %952 = vmatpush1.msra.mxu0 %v135
  %953 = vmatprep.subr.mxu0 0.0
  %954 = vmatpush1.msra.mxu0 %v136
  %955 = vmatprep.subr.mxu0 0.0
  %956 = vmatpush1.msra.mxu0 %v137
  %957 = vmatprep.subr.mxu0 0.0
  %958 = vmatpush1.msra.mxu0 %v138
  %959 = vmatprep.subr.mxu0 0.0
  %960 = vmatpush1.msra.mxu0 0.0
  %961 = vmatprep.subr.mxu0 0.0
  %962 = vmatpush1.msra.mxu0 0.0
  %963 = vmatprep.subr.mxu0 0.0
  %964 = vmatpush1.msra.mxu0 0.0
  %965 = vmatprep.subr.mxu0 0.0
  %966 = vmatpush1.msra.mxu0 0.0
  %967 = vmatprep.subr.mxu0 0.0
  %968 = vmatpush1.msra.mxu0 0.0
  %969 = vmatprep.subr.mxu0 0.0
  %970 = vmatpush1.msra.mxu0 0.0
  %971 = vmatprep.subr.mxu0 0.0
  %972 = vmatpush1.msra.mxu0 0.0
  %973 = vmatprep.subr.mxu0 0.0
  %974 = vmatpush1.msra.mxu0 0.0
  %975 = vmatprep.subr.mxu0 0.0
  %976 = vmatpush1.msra.mxu0 0.0
  %977 = vmatprep.subr.mxu0 0.0
  %978 = vmatpush1.msra.mxu0 0.0
  %979 = vmatprep.subr.mxu0 0.0
  %980 = vmatpush1.msra.mxu0 0.0
  %981 = vmatprep.subr.mxu0 0.0
  %982 = vmatpush1.msra.mxu0 0.0
  %983 = vmatprep.subr.mxu0 0.0
  %984 = vmatpush1.msra.mxu0 0.0
  %985 = vmatprep.subr.mxu0 0.0
  %986 = vmatpush1.msra.mxu0 0.0
  %987 = vmatprep.subr.mxu0 0.0
  %988 = vmatpush1.msra.mxu0 0.0
  %989 = vmatprep.subr.mxu0 0.0
  %990 = vmatpush1.msra.mxu0 0.0
  %991 = vmatprep.subr.mxu0 0.0
  %992 = vmatpush1.msra.mxu0 0.0
  %993 = vmatprep.subr.mxu0 0.0
  %994 = vmatpush1.msra.mxu0 0.0
  %995 = vmatprep.subr.mxu0 0.0
  %996 = vmatpush1.msra.mxu0 0.0
  %997 = vmatprep.subr.mxu0 0.0
  %998 = vmatpush1.msra.mxu0 0.0
  %999 = vmatprep.subr.mxu0 0.0
  %1000 = vmatpush1.msra.mxu0 0.0
  %1001 = vmatprep.subr.mxu0 0.0
  %1002 = vmatpush1.msra.mxu0 0.0
  %1003 = vmatprep.subr.mxu0 0.0
  %1004 = vmatpush1.msra.mxu0 0.0
  %1005 = vmatprep.subr.mxu0 0.0
  %1006 = vmatpush1.msra.mxu0 0.0
  %1007 = vmatprep.subr.mxu0 0.0
  %1008 = vmatpush1.msra.mxu0 0.0
  %1009 = vmatprep.subr.mxu0 0.0
  %1010 = vmatpush1.msra.mxu0 0.0
  %1011 = vmatprep.subr.mxu0 0.0
  %1012 = vmatpush1.msra.mxu0 0.0
  %1013 = vmatprep.subr.mxu0 0.0
  %1014 = vmatpush1.msra.mxu0 0.0
  %1015 = vmatprep.mubr.f32.mxu0 0.0
  %1016 = vmatmul.mubr.f32.gmra.mrb[0].mxu0 %v949
  %v1017 = vpop.f32.mrb[0].mxu0
  %v1018 = vadd.f32 0.0, %v1017
  %v1019 = vpop.f32.mrb[0].mxu0
  %1020 = vdwg.mxu0
  %v1021 = vadd.f32 %v131, %v1018
  %v1022 = vxor.u32 %v1021, 2147483648
  %v1023 = vmul.f32 %v1022, 1.442695
  %v1024 = vpow.pop %v1023
  %v1025 = vadd.f32 %v1024, 1.0
  %v1026 = vrcp.pop %v1025
  %v1027 = vmul.f32 1.0, %v1026
  %v1028 = vmul.f32 %v1027, 2.0
  %v1029 = vsub.f32 %v1028, 1.0
  %v1030 = vmul.f32 %v1027, %v939
  %1032 = vrot.lane.b32.xlu0 %v1029, 64
  %v1033 = vpop.permute.xlu0 %1032
  %v1035 = vmul.f32 %v1027, %v1033
  %1037 = vrot.lane.b32.xlu0 %v1035, 32
  %v1038 = vpop.permute.xlu0 %1037
  %v1040 = vadd.f32 %v1030, %v1038
  %v1041 = vtanh.pop %v1040
  %1043 = vrot.lane.b32.xlu0 %v1041, 64
  %v1044 = vpop.permute.xlu0 %1043
  %v1046 = vmul.f32 %v1027, %v1044
  %1048 = vrot.lane.b32.xlu0 %v1046, 32
  %v1049 = vpop.permute.xlu0 %1048
  %v1050 = vsel %vm139, %v1049, 0
  %1052 = vmatprep.subr.mxu0 0.0
  %1053 = vmatpush1.msra.mxu0 %v135
  %1054 = vmatprep.subr.mxu0 0.0
  %1055 = vmatpush1.msra.mxu0 %v136
  %1056 = vmatprep.subr.mxu0 0.0
  %1057 = vmatpush1.msra.mxu0 %v137
  %1058 = vmatprep.subr.mxu0 0.0
  %1059 = vmatpush1.msra.mxu0 %v138
  %1060 = vmatprep.subr.mxu0 0.0
  %1061 = vmatpush1.msra.mxu0 0.0
  %1062 = vmatprep.subr.mxu0 0.0
  %1063 = vmatpush1.msra.mxu0 0.0
  %1064 = vmatprep.subr.mxu0 0.0
  %1065 = vmatpush1.msra.mxu0 0.0
  %1066 = vmatprep.subr.mxu0 0.0
  %1067 = vmatpush1.msra.mxu0 0.0
  %1068 = vmatprep.subr.mxu0 0.0
  %1069 = vmatpush1.msra.mxu0 0.0
  %1070 = vmatprep.subr.mxu0 0.0
  %1071 = vmatpush1.msra.mxu0 0.0
  %1072 = vmatprep.subr.mxu0 0.0
  %1073 = vmatpush1.msra.mxu0 0.0
  %1074 = vmatprep.subr.mxu0 0.0
  %1075 = vmatpush1.msra.mxu0 0.0
  %1076 = vmatprep.subr.mxu0 0.0
  %1077 = vmatpush1.msra.mxu0 0.0
  %1078 = vmatprep.subr.mxu0 0.0
  %1079 = vmatpush1.msra.mxu0 0.0
  %1080 = vmatprep.subr.mxu0 0.0
  %1081 = vmatpush1.msra.mxu0 0.0
  %1082 = vmatprep.subr.mxu0 0.0
  %1083 = vmatpush1.msra.mxu0 0.0
  %1084 = vmatprep.subr.mxu0 0.0
  %1085 = vmatpush1.msra.mxu0 0.0
  %1086 = vmatprep.subr.mxu0 0.0
  %1087 = vmatpush1.msra.mxu0 0.0
  %1088 = vmatprep.subr.mxu0 0.0
  %1089 = vmatpush1.msra.mxu0 0.0
  %1090 = vmatprep.subr.mxu0 0.0
  %1091 = vmatpush1.msra.mxu0 0.0
  %1092 = vmatprep.subr.mxu0 0.0
  %1093 = vmatpush1.msra.mxu0 0.0
  %1094 = vmatprep.subr.mxu0 0.0
  %1095 = vmatpush1.msra.mxu0 0.0
  %1096 = vmatprep.subr.mxu0 0.0
  %1097 = vmatpush1.msra.mxu0 0.0
  %1098 = vmatprep.subr.mxu0 0.0
  %1099 = vmatpush1.msra.mxu0 0.0
  %1100 = vmatprep.subr.mxu0 0.0
  %1101 = vmatpush1.msra.mxu0 0.0
  %1102 = vmatprep.subr.mxu0 0.0
  %1103 = vmatpush1.msra.mxu0 0.0
  %1104 = vmatprep.subr.mxu0 0.0
  %1105 = vmatpush1.msra.mxu0 0.0
  %1106 = vmatprep.subr.mxu0 0.0
  %1107 = vmatpush1.msra.mxu0 0.0
  %1108 = vmatprep.subr.mxu0 0.0
  %1109 = vmatpush1.msra.mxu0 0.0
  %1110 = vmatprep.subr.mxu0 0.0
  %1111 = vmatpush1.msra.mxu0 0.0
  %1112 = vmatprep.subr.mxu0 0.0
  %1113 = vmatpush1.msra.mxu0 0.0
  %1114 = vmatprep.subr.mxu0 0.0
  %1115 = vmatpush1.msra.mxu0 0.0
  %1116 = vmatprep.mubr.f32.mxu0 0.0
  %1117 = vmatmul.mubr.f32.gmra.mrb[0].mxu0 %v1050
  %v1118 = vpop.f32.mrb[0].mxu0
  %v1119 = vadd.f32 0.0, %v1118
  %v1120 = vpop.f32.mrb[0].mxu0
  %1121 = vdwg.mxu0
  %v1122 = vadd.f32 %v132, %v1119
  %v1123 = vxor.u32 %v1122, 2147483648
  %v1124 = vmul.f32 %v1123, 1.442695
  %v1125 = vpow.pop %v1124
  %v1126 = vadd.f32 %v1125, 1.0
  %v1127 = vrcp.pop %v1126
  %v1128 = vmul.f32 1.0, %v1127
  %v1129 = vmul.f32 %v1128, 2.0
  %v1130 = vsub.f32 %v1129, 1.0
  %v1131 = vmul.f32 %v1128, %v1040
  %1133 = vrot.lane.b32.xlu0 %v1130, 64
  %v1134 = vpop.permute.xlu0 %1133
  %v1136 = vmul.f32 %v1128, %v1134
  %1138 = vrot.lane.b32.xlu0 %v1136, 32
  %v1139 = vpop.permute.xlu0 %1138
  %v1141 = vadd.f32 %v1131, %v1139
  %v1142 = vtanh.pop %v1141
  %1144 = vrot.lane.b32.xlu0 %v1142, 64
  %v1145 = vpop.permute.xlu0 %1144
  %v1147 = vmul.f32 %v1128, %v1145
  %1149 = vrot.lane.b32.xlu0 %v1147, 32
  %v1150 = vpop.permute.xlu0 %1149
  %v1151 = vsel %vm139, %v1150, 0
  %1153 = vmatprep.subr.mxu0 0.0
  %1154 = vmatpush1.msra.mxu0 %v135
  %1155 = vmatprep.subr.mxu0 0.0
  %1156 = vmatpush1.msra.mxu0 %v136
  %1157 = vmatprep.subr.mxu0 0.0
  %1158 = vmatpush1.msra.mxu0 %v137
  %1159 = vmatprep.subr.mxu0 0.0
  %1160 = vmatpush1.msra.mxu0 %v138
  %1161 = vmatprep.subr.mxu0 0.0
  %1162 = vmatpush1.msra.mxu0 0.0
  %1163 = vmatprep.subr.mxu0 0.0
  %1164 = vmatpush1.msra.mxu0 0.0
  %1165 = vmatprep.subr.mxu0 0.0
  %1166 = vmatpush1.msra.mxu0 0.0
  %1167 = vmatprep.subr.mxu0 0.0
  %1168 = vmatpush1.msra.mxu0 0.0
  %1169 = vmatprep.subr.mxu0 0.0
  %1170 = vmatpush1.msra.mxu0 0.0
  %1171 = vmatprep.subr.mxu0 0.0
  %1172 = vmatpush1.msra.mxu0 0.0
  %1173 = vmatprep.subr.mxu0 0.0
  %1174 = vmatpush1.msra.mxu0 0.0
  %1175 = vmatprep.subr.mxu0 0.0
  %1176 = vmatpush1.msra.mxu0 0.0
  %1177 = vmatprep.subr.mxu0 0.0
  %1178 = vmatpush1.msra.mxu0 0.0
  %1179 = vmatprep.subr.mxu0 0.0
  %1180 = vmatpush1.msra.mxu0 0.0
  %1181 = vmatprep.subr.mxu0 0.0
  %1182 = vmatpush1.msra.mxu0 0.0
  %1183 = vmatprep.subr.mxu0 0.0
  %1184 = vmatpush1.msra.mxu0 0.0
  %1185 = vmatprep.subr.mxu0 0.0
  %1186 = vmatpush1.msra.mxu0 0.0
  %1187 = vmatprep.subr.mxu0 0.0
  %1188 = vmatpush1.msra.mxu0 0.0
  %1189 = vmatprep.subr.mxu0 0.0
  %1190 = vmatpush1.msra.mxu0 0.0
  %1191 = vmatprep.subr.mxu0 0.0
  %1192 = vmatpush1.msra.mxu0 0.0
  %1193 = vmatprep.subr.mxu0 0.0
  %1194 = vmatpush1.msra.mxu0 0.0
  %1195 = vmatprep.subr.mxu0 0.0
  %1196 = vmatpush1.msra.mxu0 0.0
  %1197 = vmatprep.subr.mxu0 0.0
  %1198 = vmatpush1.msra.mxu0 0.0
  %1199 = vmatprep.subr.mxu0 0.0
  %1200 = vmatpush1.msra.mxu0 0.0
  %1201 = vmatprep.subr.mxu0 0.0
  %1202 = vmatpush1.msra.mxu0 0.0
  %1203 = vmatprep.subr.mxu0 0.0
  %1204 = vmatpush1.msra.mxu0 0.0
  %1205 = vmatprep.subr.mxu0 0.0
  %1206 = vmatpush1.msra.mxu0 0.0
  %1207 = vmatprep.subr.mxu0 0.0
  %1208 = vmatpush1.msra.mxu0 0.0
  %1209 = vmatprep.subr.mxu0 0.0
  %1210 = vmatpush1.msra.mxu0 0.0
  %1211 = vmatprep.subr.mxu0 0.0
  %1212 = vmatpush1.msra.mxu0 0.0
  %1213 = vmatprep.subr.mxu0 0.0
  %1214 = vmatpush1.msra.mxu0 0.0
  %1215 = vmatprep.subr.mxu0 0.0
  %1216 = vmatpush1.msra.mxu0 0.0
  %1217 = vmatprep.mubr.f32.mxu0 0.0
  %1218 = vmatmul.mubr.f32.gmra.mrb[0].mxu0 %v1151
  %v1219 = vpop.f32.mrb[0].mxu0
  %v1220 = vadd.f32 0.0, %v1219
  %v1221 = vpop.f32.mrb[0].mxu0
  %1222 = vdwg.mxu0
  %v1223 = vadd.f32 %v133, %v1220
  %v1224 = vxor.u32 %v1223, 2147483648
  %v1225 = vmul.f32 %v1224, 1.442695
  %v1226 = vpow.pop %v1225
  %v1227 = vadd.f32 %v1226, 1.0
  %v1228 = vrcp.pop %v1227
  %v1229 = vmul.f32 1.0, %v1228
  %v1230 = vmul.f32 %v1229, 2.0
  %v1231 = vsub.f32 %v1230, 1.0
  %v1232 = vmul.f32 %v1229, %v1141
  %1234 = vrot.lane.b32.xlu0 %v1231, 64
  %v1235 = vpop.permute.xlu0 %1234
  %v1237 = vmul.f32 %v1229, %v1235
  %1239 = vrot.lane.b32.xlu0 %v1237, 32
  %v1240 = vpop.permute.xlu0 %1239
  %v1242 = vadd.f32 %v1232, %v1240
  %v1243 = vtanh.pop %v1242
  %1245 = vrot.lane.b32.xlu0 %v1243, 64
  %v1246 = vpop.permute.xlu0 %1245
  %v1248 = vmul.f32 %v1229, %v1246
  %1250 = vrot.lane.b32.xlu0 %v1248, 32
  %v1251 = vpop.permute.xlu0 %1250
  %v1252 = vsel %vm139, %v1251, 0
  %1254 = vmatprep.subr.mxu0 0.0
  %1255 = vmatpush1.msra.mxu0 %v135
  %1256 = vmatprep.subr.mxu0 0.0
  %1257 = vmatpush1.msra.mxu0 %v136
  %1258 = vmatprep.subr.mxu0 0.0
  %1259 = vmatpush1.msra.mxu0 %v137
  %1260 = vmatprep.subr.mxu0 0.0
  %1261 = vmatpush1.msra.mxu0 %v138
  %1262 = vmatprep.subr.mxu0 0.0
  %1263 = vmatpush1.msra.mxu0 0.0
  %1264 = vmatprep.subr.mxu0 0.0
  %1265 = vmatpush1.msra.mxu0 0.0
  %1266 = vmatprep.subr.mxu0 0.0
  %1267 = vmatpush1.msra.mxu0 0.0
  %1268 = vmatprep.subr.mxu0 0.0
  %1269 = vmatpush1.msra.mxu0 0.0
  %1270 = vmatprep.subr.mxu0 0.0
  %1271 = vmatpush1.msra.mxu0 0.0
  %1272 = vmatprep.subr.mxu0 0.0
  %1273 = vmatpush1.msra.mxu0 0.0
  %1274 = vmatprep.subr.mxu0 0.0
  %1275 = vmatpush1.msra.mxu0 0.0
  %1276 = vmatprep.subr.mxu0 0.0
  %1277 = vmatpush1.msra.mxu0 0.0
  %1278 = vmatprep.subr.mxu0 0.0
  %1279 = vmatpush1.msra.mxu0 0.0
  %1280 = vmatprep.subr.mxu0 0.0
  %1281 = vmatpush1.msra.mxu0 0.0
  %1282 = vmatprep.subr.mxu0 0.0
  %1283 = vmatpush1.msra.mxu0 0.0
  %1284 = vmatprep.subr.mxu0 0.0
  %1285 = vmatpush1.msra.mxu0 0.0
  %1286 = vmatprep.subr.mxu0 0.0
  %1287 = vmatpush1.msra.mxu0 0.0
  %1288 = vmatprep.subr.mxu0 0.0
  %1289 = vmatpush1.msra.mxu0 0.0
  %1290 = vmatprep.subr.mxu0 0.0
  %1291 = vmatpush1.msra.mxu0 0.0
  %1292 = vmatprep.subr.mxu0 0.0
  %1293 = vmatpush1.msra.mxu0 0.0
  %1294 = vmatprep.subr.mxu0 0.0
  %1295 = vmatpush1.msra.mxu0 0.0
  %1296 = vmatprep.subr.mxu0 0.0
  %1297 = vmatpush1.msra.mxu0 0.0
  %1298 = vmatprep.subr.mxu0 0.0
  %1299 = vmatpush1.msra.mxu0 0.0
  %1300 = vmatprep.subr.mxu0 0.0
  %1301 = vmatpush1.msra.mxu0 0.0
  %1302 = vmatprep.subr.mxu0 0.0
  %1303 = vmatpush1.msra.mxu0 0.0
  %1304 = vmatprep.subr.mxu0 0.0
  %1305 = vmatpush1.msra.mxu0 0.0
  %1306 = vmatprep.subr.mxu0 0.0
  %1307 = vmatpush1.msra.mxu0 0.0
  %1308 = vmatprep.subr.mxu0 0.0
  %1309 = vmatpush1.msra.mxu0 0.0
  %1310 = vmatprep.subr.mxu0 0.0
  %1311 = vmatpush1.msra.mxu0 0.0
  %1312 = vmatprep.subr.mxu0 0.0
  %1313 = vmatpush1.msra.mxu0 0.0
  %1314 = vmatprep.subr.mxu0 0.0
  %1315 = vmatpush1.msra.mxu0 0.0
  %1316 = vmatprep.subr.mxu0 0.0
  %1317 = vmatpush1.msra.mxu0 0.0
  %1318 = vmatprep.mubr.f32.mxu0 0.0
  %1319 = vmatmul.mubr.f32.gmra.mrb[0].mxu0 %v1252
  %v1320 = vpop.f32.mrb[0].mxu0
  %v1321 = vadd.f32 0.0, %v1320
  %v1322 = vpop.f32.mrb[0].mxu0
  %1323 = vdwg.mxu0
  %v1324 = vadd.f32 %v134, %v1321
  %v1325 = vxor.u32 %v1324, 2147483648
  %v1326 = vmul.f32 %v1325, 1.442695
  %v1327 = vpow.pop %v1326
  %v1328 = vadd.f32 %v1327, 1.0
  %v1329 = vrcp.pop %v1328
  %v1330 = vmul.f32 1.0, %v1329
  %v1331 = vmul.f32 %v1330, 2.0
  %v1332 = vsub.f32 %v1331, 1.0
  %v1333 = vmul.f32 %v1330, %v1242
  %1335 = vrot.lane.b32.xlu0 %v1332, 64
  %v1336 = vpop.permute.xlu0 %1335
  %v1338 = vmul.f32 %v1330, %v1336
  %1340 = vrot.lane.b32.xlu0 %v1338, 32
  %v1341 = vpop.permute.xlu0 %1340
  %v1343 = vadd.f32 %v1333, %v1341
  %v1344 = vtanh.pop %v1343
  %1346 = vrot.lane.b32.xlu0 %v1344, 64
  %v1347 = vpop.permute.xlu0 %1346
  %v1349 = vmul.f32 %v1330, %v1347
  %v1350 = vld [vmem:[%s4] sm:$0xff]
  %v1351 = vld [vmem:[%s4 + $0x8] sm:$0xff]
  %v1352 = vld [vmem:[%s4 + $0x10] sm:$0xff]
  %v1353 = vld [vmem:[%s4 + $0x18] sm:$0xff]
  %v1354 = vld [vmem:[#allocation2] sm:$0x1]
  %v1356 = vlaneseq
  %v1357 = vshrl.u32 %v1356, 7
  %v1358 = vsub.s32 0, %v1357
  %v1359 = vrot.slane %v1354, %v1358
  %1362 = vrot.lane.b32.xlu0 %v1349, 32
  %v1363 = vpop.permute.xlu0 %1362
  %v1364 = vsel %vm139, %v1363, 0
  %1366 = vmatprep.subr.mxu0 0.0
  %1367 = vmatpush1.msra.mxu0 %v1350
  %1368 = vmatprep.subr.mxu0 0.0
  %1369 = vmatpush1.msra.mxu0 %v1351
  %1370 = vmatprep.subr.mxu0 0.0
  %1371 = vmatpush1.msra.mxu0 %v1352
  %1372 = vmatprep.subr.mxu0 0.0
  %1373 = vmatpush1.msra.mxu0 %v1353
  %1374 = vmatprep.subr.mxu0 0.0
  %1375 = vmatpush1.msra.mxu0 0.0
  %1376 = vmatprep.subr.mxu0 0.0
  %1377 = vmatpush1.msra.mxu0 0.0
  %1378 = vmatprep.subr.mxu0 0.0
  %1379 = vmatpush1.msra.mxu0 0.0
  %1380 = vmatprep.subr.mxu0 0.0
  %1381 = vmatpush1.msra.mxu0 0.0
  %1382 = vmatprep.subr.mxu0 0.0
  %1383 = vmatpush1.msra.mxu0 0.0
  %1384 = vmatprep.subr.mxu0 0.0
  %1385 = vmatpush1.msra.mxu0 0.0
  %1386 = vmatprep.subr.mxu0 0.0
  %1387 = vmatpush1.msra.mxu0 0.0
  %1388 = vmatprep.subr.mxu0 0.0
  %1389 = vmatpush1.msra.mxu0 0.0
  %1390 = vmatprep.subr.mxu0 0.0
  %1391 = vmatpush1.msra.mxu0 0.0
  %1392 = vmatprep.subr.mxu0 0.0
  %1393 = vmatpush1.msra.mxu0 0.0
  %1394 = vmatprep.subr.mxu0 0.0
  %1395 = vmatpush1.msra.mxu0 0.0
  %1396 = vmatprep.subr.mxu0 0.0
  %1397 = vmatpush1.msra.mxu0 0.0
  %1398 = vmatprep.subr.mxu0 0.0
  %1399 = vmatpush1.msra.mxu0 0.0
  %1400 = vmatprep.subr.mxu0 0.0
  %1401 = vmatpush1.msra.mxu0 0.0
  %1402 = vmatprep.subr.mxu0 0.0
  %1403 = vmatpush1.msra.mxu0 0.0
  %1404 = vmatprep.subr.mxu0 0.0
  %1405 = vmatpush1.msra.mxu0 0.0
  %1406 = vmatprep.subr.mxu0 0.0
  %1407 = vmatpush1.msra.mxu0 0.0
  %1408 = vmatprep.subr.mxu0 0.0
  %1409 = vmatpush1.msra.mxu0 0.0
  %1410 = vmatprep.subr.mxu0 0.0
  %1411 = vmatpush1.msra.mxu0 0.0
  %1412 = vmatprep.subr.mxu0 0.0
  %1413 = vmatpush1.msra.mxu0 0.0
  %1414 = vmatprep.subr.mxu0 0.0
  %1415 = vmatpush1.msra.mxu0 0.0
  %1416 = vmatprep.subr.mxu0 0.0
  %1417 = vmatpush1.msra.mxu0 0.0
  %1418 = vmatprep.subr.mxu0 0.0
  %1419 = vmatpush1.msra.mxu0 0.0
  %1420 = vmatprep.subr.mxu0 0.0
  %1421 = vmatpush1.msra.mxu0 0.0
  %1422 = vmatprep.subr.mxu0 0.0
  %1423 = vmatpush1.msra.mxu0 0.0
  %1424 = vmatprep.subr.mxu0 0.0
  %1425 = vmatpush1.msra.mxu0 0.0
  %1426 = vmatprep.subr.mxu0 0.0
  %1427 = vmatpush1.msra.mxu0 0.0
  %1428 = vmatprep.subr.mxu0 0.0
  %1429 = vmatpush1.msra.mxu0 0.0
  %1430 = vmatprep.mubr.f32.mxu0 0.0
  %1431 = vmatmul.mubr.f32.gmra.mrb[0].mxu0 %v747
  %v1432 = vpop.f32.mrb[0].mxu0
  %v1433 = vadd.f32 %v1359, %v1432
  %v1434 = vpop.f32.mrb[0].mxu0
  %1435 = vmatprep.mubr.f32.mxu0 0.0
  %1436 = vmatmul.mubr.f32.gmra.mrb[0].mxu0 %v848
  %v1437 = vpop.f32.mrb[0].mxu0
  %v1438 = vadd.f32 %v1359, %v1437
  %v1439 = vpop.f32.mrb[0].mxu0
  %1440 = vmatprep.mubr.f32.mxu0 0.0
  %1441 = vmatmul.mubr.f32.gmra.mrb[0].mxu0 %v949
  %v1442 = vpop.f32.mrb[0].mxu0
  %v1443 = vadd.f32 %v1359, %v1442
  %v1444 = vpop.f32.mrb[0].mxu0
  %1445 = vmatprep.mubr.f32.mxu0 0.0
  %1446 = vmatmul.mubr.f32.gmra.mrb[0].mxu0 %v1050
  %v1447 = vpop.f32.mrb[0].mxu0
  %v1448 = vadd.f32 %v1359, %v1447
  %v1449 = vpop.f32.mrb[0].mxu0
  %1450 = vmatprep.mubr.f32.mxu0 0.0
  %1451 = vmatmul.mubr.f32.gmra.mrb[0].mxu0 %v1151
  %v1452 = vpop.f32.mrb[0].mxu0
  %v1453 = vadd.f32 %v1359, %v1452
  %v1454 = vpop.f32.mrb[0].mxu0
  %1455 = vmatprep.mubr.f32.mxu0 0.0
  %1456 = vmatmul.mubr.f32.gmra.mrb[0].mxu0 %v1252
  %v1457 = vpop.f32.mrb[0].mxu0
  %v1458 = vadd.f32 %v1359, %v1457
  %v1459 = vpop.f32.mrb[0].mxu0
  %1460 = vmatprep.mubr.f32.mxu0 0.0
  %1461 = vmatmul.mubr.f32.gmra.mrb[0].mxu0 %v1364
  %v1462 = vpop.f32.mrb[0].mxu0
  %v1463 = vadd.f32 %v1359, %v1462
  %v1464 = vpop.f32.mrb[0].mxu0
  %1465 = vdwg.mxu0
  %vm1466 = vcmask 7168
  %1467 = vst.msk [vmem:[%s6] sm:$0xff] %vm1466, %v1433
  %1468 = vst.msk [vmem:[%s6 + $0x8] sm:$0xff] %vm1466, %v1438
  %1469 = vst.msk [vmem:[%s6 + $0x10] sm:$0xff] %vm1466, %v1443
  %1470 = vst.msk [vmem:[%s6 + $0x18] sm:$0xff] %vm1466, %v1448
  %1471 = vst.msk [vmem:[%s6 + $0x20] sm:$0xff] %vm1466, %v1453
  %1472 = vst.msk [vmem:[%s6 + $0x28] sm:$0xff] %vm1466, %v1458
  %1473 = vst.msk [vmem:[%s6 + $0x30] sm:$0xff] %vm1466, %v1463
  // Predicated region
  $region26: #{lstm_model_forward.1} parent=0 // pred_check
    _
  $region27: #{lstm_model_forward.1} parent=0 // pred_check_branch
    %1475 = sbr.rel (0) target = $region29
  $region28: #{lstm_model_forward.1} parent=0 // pred_region
    _
  $region29: #{lstm_model_forward.1} parent=0 // pred_fallthru
    _
  // Predicated region
  $region30: #{lstm_model_forward.1} parent=0 // pred_check
    _
  $region31: #{lstm_model_forward.1} parent=0 // pred_check_branch
    %1477 = sbr.rel (0) target = $region33
  $region32: #{lstm_model_forward.1} parent=0 // pred_region
    _
  $region33: #{lstm_model_forward.1} parent=0 // pred_fallthru
    _

</llo_original>
